<compile_context>
chip_gen: v7x
topology: tpu7x:2x2x1
jax: 0.10.0
libtpu: 0.0.40
codegen_flags: <defaults>
</compile_context>

<pallas_src>
import functools

import jax
import jax.numpy as jnp
from jax.experimental import pallas as pl
from jax.experimental.pallas import tpu as pltpu

BN_EPS = 1e-5
EXPANSION = 4
# (planes, num_blocks, first_stride) for layer1..layer4 of ResNet-101
LAYER_CFG = [(64, 3, 1), (128, 4, 2), (256, 23, 2), (512, 3, 2)]
LANE = 128


def _rup(x, m):
    return -(-x // m) * m


def _vmem_limit():
    # v7x: 64 MiB physical VMEM / TensorCore -> 48 MiB scoped; v5e/v6e: 128 MiB -> 96 MiB.
    cap = 64 * 1024 * 1024
    try:
        info = pltpu.get_tpu_info()
        cap = getattr(info, "vmem_capacity_bytes", cap) or cap
    except Exception:
        pass
    return int(min(96 * 1024 * 1024, cap * 3 // 4))


_VMEM_LIMIT = _vmem_limit()


def _pad_axis(x, axis, size):
    if x.shape[axis] == size:
        return x
    cfg = [(0, 0)] * x.ndim
    cfg[axis] = (0, size - x.shape[axis])
    return jnp.pad(x, cfg)


# ------------------------------------------------------------------ tiled GEMM + BN(+ReLU)(+residual)

def _gemm_bn_kernel(x_ref, w_ref, s_ref, b_ref, o_ref, acc_ref, *, relu):
    @pl.when(pl.program_id(2) == 0)
    def _():
        acc_ref[...] = jnp.zeros_like(acc_ref)

    acc_ref[...] += jnp.dot(x_ref[...], w_ref[...], preferred_element_type=jnp.float32)

    @pl.when(pl.program_id(2) == pl.num_programs(2) - 1)
    def _():
        y = acc_ref[...] * s_ref[...] + b_ref[...]
        if relu:
            y = jnp.maximum(y, 0.0)
        o_ref[...] = y.astype(o_ref.dtype)


def _gemm_bn_res_kernel(x_ref, w_ref, s_ref, b_ref, r_ref, o_ref, acc_ref):
    @pl.when(pl.program_id(2) == 0)
    def _():
        acc_ref[...] = jnp.zeros_like(acc_ref)

    acc_ref[...] += jnp.dot(x_ref[...], w_ref[...], preferred_element_type=jnp.float32)

    @pl.when(pl.program_id(2) == pl.num_programs(2) - 1)
    def _():
        y = acc_ref[...] * s_ref[...] + b_ref[...] + r_ref[...].astype(jnp.float32)
        o_ref[...] = jnp.maximum(y, 0.0).astype(o_ref.dtype)


def _pick_tm(m):
    """Largest M tile <= 512 (multiple of 8) that avoids HBM pad round trips where possible."""
    mp = _rup(m, 8)
    if mp <= 512:
        return mp, mp
    tm = 8
    for cand in range(512, 7, -8):
        if mp % cand == 0:
            tm = cand
            break
    if tm < 128:  # pathological divisor structure: accept padding M to a 256 multiple instead
        mp = _rup(m, 256)
        tm = 256
    return mp, tm


def _gemm_bn(x, w, scale, bias, residual, relu):
    """x:(M,K) bf16, w:(Kp,Cp) bf16, scale/bias:(1,Cp) f32, residual:(M,Cp) bf16 or None."""
    m, k = x.shape
    kp, cn = w.shape
    assert cn % LANE == 0 and kp % LANE == 0
    x = _pad_axis(x, 1, kp)

    mp, tm = _pick_tm(m)
    x = _pad_axis(x, 0, mp)

    tk = 256 if kp % 256 == 0 else LANE
    tn = 512 if cn % 512 == 0 else (256 if cn % 256 == 0 else LANE)
    grid = (mp // tm, cn // tn, kp // tk)

    in_specs = [
        pl.BlockSpec((tm, tk), lambda i, j, kk: (i, kk)),
        pl.BlockSpec((tk, tn), lambda i, j, kk: (kk, j)),
        pl.BlockSpec((1, tn), lambda i, j, kk: (0, j)),
        pl.BlockSpec((1, tn), lambda i, j, kk: (0, j)),
    ]
    args = [x, w, scale, bias]
    if residual is not None:
        residual = _pad_axis(residual, 0, mp)
        in_specs.append(pl.BlockSpec((tm, tn), lambda i, j, kk: (i, j)))
        args.append(residual)
        kernel = _gemm_bn_res_kernel
    else:
        kernel = functools.partial(_gemm_bn_kernel, relu=relu)

    out = pl.pallas_call(
        kernel,
        out_shape=jax.ShapeDtypeStruct((mp, cn), jnp.bfloat16),
        grid_spec=pltpu.PrefetchScalarGridSpec(
            num_scalar_prefetch=0,
            grid=grid,
            in_specs=in_specs,
            out_specs=pl.BlockSpec((tm, tn), lambda i, j, kk: (i, j)),
            scratch_shapes=[pltpu.VMEM((tm, tn), jnp.float32)],
        ),
        compiler_params=pltpu.CompilerParams(
            dimension_semantics=("parallel", "parallel", "arbitrary"),
            vmem_limit_bytes=_VMEM_LIMIT,
        ),
    )(*args)
    if mp != m:
        out = out[:m]
    return out


@functools.partial(jax.jit, static_argnames=("stride", "relu"))
def conv1x1_bn(x, w, scale, bias, *, stride, relu):
    if stride > 1:
        x = x[:, ::stride, ::stride, :]
    n, h, wd, c = x.shape
    out = _gemm_bn(x.reshape(n * h * wd, c), w, scale, bias, None, relu)
    return out.reshape(n, h, wd, -1)


@jax.jit
def conv1x1_bn_add_relu(x, w, scale, bias, residual):
    n, h, wd, c = x.shape
    cout = w.shape[1]
    out = _gemm_bn(x.reshape(n * h * wd, c), w, scale, bias,
                   residual.reshape(n * h * wd, cout), True)
    return out.reshape(n, h, wd, cout)


@jax.jit
def fc_layer(x2d, w, scale, bias):
    return _gemm_bn(x2d, w, scale, bias, None, False)


# ------------------------------------------------------------------ im2col fallback (stem 7x7 + stride-2 3x3)

def _im2col(x, kh, kw, stride, pad):
    n, h, w, c = x.shape
    xp = jnp.pad(x, ((0, 0), (pad, pad), (pad, pad), (0, 0)))
    ho = (h + 2 * pad - kh) // stride + 1
    wo = (w + 2 * pad - kw) // stride + 1
    cols = []
    for i in range(kh):
        for j in range(kw):
            cols.append(xp[:, i:i + stride * ho:stride, j:j + stride * wo:stride, :])
    patches = jnp.stack(cols, axis=3)  # (N, Ho, Wo, kh*kw, C)
    return patches.reshape(n * ho * wo, kh * kw * c), ho, wo


@functools.partial(jax.jit, static_argnames=("kh", "kw", "stride", "pad", "relu"))
def conv_im2col_bn(x, w, scale, bias, *, kh, kw, stride, pad, relu):
    n = x.shape[0]
    patches, ho, wo = _im2col(x, kh, kw, stride, pad)
    out = _gemm_bn(patches, w, scale, bias, None, relu)
    return out.reshape(n, ho, wo, -1)


# ------------------------------------------------------------------ fused stride-1 3x3 conv (no HBM im2col)

def _conv3_kernel(x_ref, w_ref, s_ref, b_ref, o_ref, xs_ref, acc_ref, *, wp):
    # x_ref: (1, (H+3)*wp, Cin) flattened padded image (wp is a multiple of 8 -> aligned pitch).
    # w_ref: (3, 3, Cin, tn); o_ref: (1, Ho, wp, tn) (columns >= Wo are garbage, stripped outside).
    # xs_ref: ((Ho+2)*wp, Cin) bf16 scratch holding the dj-shifted image;
    # acc_ref: (Ho*wp, tn) f32 accumulator scratch.
    _, ho, _, tn = o_ref.shape
    rows = ho * wp
    acc_ref[...] = jnp.zeros_like(acc_ref)
    for dj in range(3):
        # One sublane-unaligned shift per dj, materialized once; the three di tap reads below
        # are sublane-aligned views of the scratch ("wide GEMM" over the flattened image).
        xs_ref[...] = x_ref[0, dj:dj + (ho + 2) * wp, :]
        for di in range(3):
            lhs = xs_ref[di * wp:di * wp + rows, :]
            acc_ref[...] += jnp.dot(lhs, w_ref[di, dj], preferred_element_type=jnp.float32)
    y = jnp.maximum(acc_ref[...] * s_ref[...] + b_ref[...], 0.0)
    o_ref[0] = y.reshape(ho, wp, tn).astype(o_ref.dtype)


@jax.jit
def conv3x3_bn_relu(x, w, scale, bias):
    n, h, wd, cin = x.shape
    cout = w.shape[3]
    wp = _rup(wd + 2, 8)
    # pad: 1 top / 2 bottom rows (conv pad + safety row for the wide flattened reads),
    # 1 left col, (wp-wd-1) right cols so the flattened row pitch is sublane-aligned.
    xp = jnp.pad(x, ((0, 0), (1, 2), (1, wp - wd - 1), (0, 0)))
    xf = xp.reshape(n, (h + 3) * wp, cin)
    tn = 512 if cout % 512 == 0 else (256 if cout % 256 == 0 else LANE)
    grid = (n, cout // tn)
    out = pl.pallas_call(
        functools.partial(_conv3_kernel, wp=wp),
        out_shape=jax.ShapeDtypeStruct((n, h, wp, cout), jnp.bfloat16),
        grid_spec=pltpu.PrefetchScalarGridSpec(
            num_scalar_prefetch=0,
            grid=grid,
            in_specs=[
                pl.BlockSpec((1, (h + 3) * wp, cin), lambda b, j: (b, 0, 0)),
                pl.BlockSpec((3, 3, cin, tn), lambda b, j: (0, 0, 0, j)),
                pl.BlockSpec((1, tn), lambda b, j: (0, j)),
                pl.BlockSpec((1, tn), lambda b, j: (0, j)),
            ],
            out_specs=pl.BlockSpec((1, h, wp, tn), lambda b, j: (b, 0, 0, j)),
            scratch_shapes=[
                pltpu.VMEM(((h + 2) * wp, cin), jnp.bfloat16),
                pltpu.VMEM((h * wp, tn), jnp.float32),
            ],
        ),
        compiler_params=pltpu.CompilerParams(
            # image axis parallel, Cout axis arbitrary: 2-TC chips split over images rather
            # than duplicating the whole-image DMA on both cores.
            dimension_semantics=("parallel", "arbitrary"),
            vmem_limit_bytes=_VMEM_LIMIT,
        ),
    )(xf, w, scale, bias)
    return out[:, :, :wd, :]   # strip the alignment/garbage columns of the wide-GEMM slab


# ------------------------------------------------------------------ 3x3/s2/p1 max-pool via parity split

def _maxpool_kernel(ee_ref, eo_ref, oe_ref, oo_ref, o_ref):
    _, ho, wo, _ = o_ref.shape
    ee = ee_ref[0]
    eo = eo_ref[0]
    oe = oe_ref[0]
    oo = oo_ref[0]
    m = ee[0:ho, 0:wo, :]
    m = jnp.maximum(m, ee[0:ho, 1:wo + 1, :])
    m = jnp.maximum(m, ee[1:ho + 1, 0:wo, :])
    m = jnp.maximum(m, ee[1:ho + 1, 1:wo + 1, :])
    m = jnp.maximum(m, eo[0:ho, 0:wo, :])
    m = jnp.maximum(m, eo[1:ho + 1, 0:wo, :])
    m = jnp.maximum(m, oe[0:ho, 0:wo, :])
    m = jnp.maximum(m, oe[0:ho, 1:wo + 1, :])
    m = jnp.maximum(m, oo[0:ho, 0:wo, :])
    o_ref[0] = m.astype(o_ref.dtype)


@jax.jit
def maxpool_3x3_s2_p1(x):
    # NOTE: assumes even H/W (true after the stride-2 stem conv in ResNet).
    n, h, w, c = x.shape
    ho, wo = h // 2, w // 2
    xp = jnp.pad(x, ((0, 0), (1, 1), (1, 1), (0, 0)), constant_values=float("-inf"))
    ee = xp[:, 0::2, 0::2, :]
    eo = xp[:, 0::2, 1::2, :]
    oe = xp[:, 1::2, 0::2, :]
    oo = xp[:, 1::2, 1::2, :]
    in_spec = pl.BlockSpec((1, ho + 1, wo + 1, c), lambda b: (b, 0, 0, 0))
    return pl.pallas_call(
        _maxpool_kernel,
        out_shape=jax.ShapeDtypeStruct((n, ho, wo, c), x.dtype),
        grid_spec=pltpu.PrefetchScalarGridSpec(
            num_scalar_prefetch=0,
            grid=(n,),
            in_specs=[in_spec, in_spec, in_spec, in_spec],
            out_specs=pl.BlockSpec((1, ho, wo, c), lambda b: (b, 0, 0, 0)),
        ),
        compiler_params=pltpu.CompilerParams(
            dimension_semantics=("parallel",),
            vmem_limit_bytes=_VMEM_LIMIT,
        ),
    )(ee, eo, oe, oo)


# ------------------------------------------------------------------ global average pool

def _gap_kernel(x_ref, o_ref, *, denom):
    s = jnp.sum(x_ref[...].astype(jnp.float32), axis=1) * (1.0 / denom)
    o_ref[...] = s.astype(o_ref.dtype)


@jax.jit
def global_avg_pool(x):
    n, h, w, c = x.shape
    return pl.pallas_call(
        functools.partial(_gap_kernel, denom=float(h * w)),
        out_shape=jax.ShapeDtypeStruct((n, c), jnp.bfloat16),
        compiler_params=pltpu.CompilerParams(vmem_limit_bytes=_VMEM_LIMIT),
    )(x.reshape(n, h * w, c))


# ------------------------------------------------------------------ parameter init (deterministic, synthetic)
# TODO(synk): torchvision pretrained weights cannot be loaded in-script; synthetic params keep the
#             exact ResNet-101 architecture / dataflow.

class KeyGen:
    def __init__(self, seed):
        self._key = jax.random.PRNGKey(seed)

    def __call__(self):
        self._key, sub = jax.random.split(self._key)
        return sub


def conv_init(kg, cout, cin, kh, kw):
    return jax.random.normal(kg(), (cout, cin, kh, kw), jnp.float32) * 0.05


def bn_init(kg, c):
    gamma = jax.random.uniform(kg(), (c,), jnp.float32, 0.5, 1.5)
    beta = jax.random.normal(kg(), (c,), jnp.float32) * 0.1
    mean = jax.random.normal(kg(), (c,), jnp.float32) * 0.1
    var = jax.random.uniform(kg(), (c,), jnp.float32, 0.5, 1.5)
    return (gamma, beta, mean, var)


def init_bottleneck(kg, inplanes, planes, stride, downsample):
    p = {
        "conv1": conv_init(kg, planes, inplanes, 1, 1),
        "bn1": bn_init(kg, planes),
        "conv2": conv_init(kg, planes, planes, 3, 3),
        "bn2": bn_init(kg, planes),
        "conv3": conv_init(kg, planes * EXPANSION, planes, 1, 1),
        "bn3": bn_init(kg, planes * EXPANSION),
        "stride": stride,
    }
    if downsample:
        p["ds_conv"] = conv_init(kg, planes * EXPANSION, inplanes, 1, 1)
        p["ds_bn"] = bn_init(kg, planes * EXPANSION)
    return p


def init_resnet101(seed, n_classes):
    kg = KeyGen(seed)
    params = {"conv1": conv_init(kg, 64, 3, 7, 7), "bn1": bn_init(kg, 64)}
    inplanes = 64
    stages = []
    for planes, blocks, stride in LAYER_CFG:
        blks = []
        for b in range(blocks):
            s = stride if b == 0 else 1
            ds = (b == 0) and (s != 1 or inplanes != planes * EXPANSION)
            blks.append(init_bottleneck(kg, inplanes, planes, s, ds))
            inplanes = planes * EXPANSION
        stages.append(blks)
    params["stages"] = stages
    params["fc_w"] = jax.random.normal(kg(), (512 * EXPANSION, n_classes), jnp.float32) * 0.02
    params["fc_b"] = jax.random.normal(kg(), (n_classes,), jnp.float32) * 0.01
    return params


# ------------------------------------------------------------------ parameter prep (fold BN, pad channels, bf16)

def _fold_bn(bn):
    gamma, beta, mean, var = bn
    inv = gamma / jnp.sqrt(var + BN_EPS)
    return inv, beta - mean * inv


def _prep_conv_bn(w, bn, stride, cin_pad):
    cout, cin, kh, kw = w.shape
    coutp = _rup(cout, LANE)
    scale, bias = _fold_bn(bn)
    scale = _pad_axis(scale, 0, coutp).reshape(1, coutp).astype(jnp.float32)
    bias = _pad_axis(bias, 0, coutp).reshape(1, coutp).astype(jnp.float32)
    w_hwio = jnp.transpose(w, (2, 3, 1, 0))            # (kh, kw, Cin, Cout)
    w_hwio = _pad_axis(w_hwio, 2, cin_pad)
    w_hwio = _pad_axis(w_hwio, 3, coutp)
    if kh == 1 and kw == 1:
        kind = "gemm"
        wk = w_hwio.reshape(cin_pad, coutp).astype(jnp.bfloat16)
    elif kh == 3 and kw == 3 and stride == 1:
        kind = "conv3"
        wk = w_hwio.astype(jnp.bfloat16)
    else:
        kind = "im2col"
        k = kh * kw * cin_pad
        # pad K to a multiple of 256 so the GEMM never falls back to tk=128 (half-filled MXU pass)
        wk = _pad_axis(w_hwio.reshape(k, coutp), 0, _rup(k, 256)).astype(jnp.bfloat16)
    return {"kind": kind, "w": wk, "scale": scale, "bias": bias,
            "stride": stride, "kh": kh, "kw": kw, "pad": (kh - 1) // 2}


def prep_bottleneck(raw, inplanes):
    inp = _rup(inplanes, LANE)
    planes = raw["conv1"].shape[0]
    planes_p = _rup(planes, LANE)
    spec = {
        "conv1": _prep_conv_bn(raw["conv1"], raw["bn1"], 1, inp),
        "conv2": _prep_conv_bn(raw["conv2"], raw["bn2"], raw["stride"], planes_p),
        "conv3": _prep_conv_bn(raw["conv3"], raw["bn3"], 1, planes_p),
    }
    if "ds_conv" in raw:
        spec["downsample"] = _prep_conv_bn(raw["ds_conv"], raw["ds_bn"], raw["stride"], inp)
    return spec


def prepare_params(raw):
    prep = {"conv1": _prep_conv_bn(raw["conv1"], raw["bn1"], 2, 3)}
    inplanes = 64
    stages = []
    for (planes, _, _), raw_blocks in zip(LAYER_CFG, raw["stages"]):
        blks = []
        for rb in raw_blocks:
            blks.append(prep_bottleneck(rb, inplanes))
            inplanes = planes * EXPANSION
        stages.append(blks)
    prep["stages"] = stages
    n_classes = raw["fc_w"].shape[1]
    ncp = _rup(n_classes, LANE)
    prep["fc_w"] = _pad_axis(raw["fc_w"], 1, ncp).astype(jnp.bfloat16)
    prep["fc_scale"] = jnp.ones((1, ncp), jnp.float32)
    prep["fc_bias"] = _pad_axis(raw["fc_b"], 0, ncp).reshape(1, ncp).astype(jnp.float32)
    prep["n_classes"] = n_classes
    return prep


# ------------------------------------------------------------------ forward pass

def apply_conv_bn(x, spec, *, relu=True, residual=None):
    kind = spec["kind"]
    if kind == "gemm":
        if residual is not None:
            return conv1x1_bn_add_relu(x, spec["w"], spec["scale"], spec["bias"], residual)
        return conv1x1_bn(x, spec["w"], spec["scale"], spec["bias"],
                          stride=spec["stride"], relu=relu)
    if kind == "conv3":
        return conv3x3_bn_relu(x, spec["w"], spec["scale"], spec["bias"])
    return conv_im2col_bn(x, spec["w"], spec["scale"], spec["bias"],
                          kh=spec["kh"], kw=spec["kw"], stride=spec["stride"],
                          pad=spec["pad"], relu=relu)


def bottleneck_forward(x, blk):
    out = apply_conv_bn(x, blk["conv1"], relu=True)
    out = apply_conv_bn(out, blk["conv2"], relu=True)
    if "downsample" in blk:
        identity = apply_conv_bn(x, blk["downsample"], relu=False)
    else:
        identity = x
    # conv3 + BN + residual add + ReLU fused in one Pallas GEMM epilogue
    return apply_conv_bn(out, blk["conv3"], residual=identity)


def resnet101_forward(prep, x_nchw):
    x = jnp.transpose(x_nchw, (0, 2, 3, 1)).astype(jnp.bfloat16)   # NCHW -> NHWC
    x = apply_conv_bn(x, prep["conv1"], relu=True)
    x = maxpool_3x3_s2_p1(x)
    for stage in prep["stages"]:
        for blk in stage:
            x = bottleneck_forward(x, blk)
    pooled = global_avg_pool(x)                                    # (N, 2048)
    logits = fc_layer(pooled, prep["fc_w"], prep["fc_scale"], prep["fc_bias"])
    return logits[:, :prep["n_classes"]].astype(jnp.float32)


# ------------------------------------------------------------------ main

if __name__ == "__main__":
    N_CLASSES = 2  # dog / cat
    x = jax.random.normal(jax.random.PRNGKey(0), (2, 3, 32, 32), jnp.float32)

    raw_params = init_resnet101(seed=0, n_classes=N_CLASSES)
    params = prepare_params(raw_params)

    logits = resnet101_forward(params, x)
    logits = jax.block_until_ready(logits)

    assert logits.shape == (2, N_CLASSES), logits.shape
    assert bool(jnp.all(jnp.isfinite(logits)))
    print("KERNEL_OK")
</pallas_src>

<mosaic_0001>
module attributes {stable_mosaic.version = 11 : i64} {
  func.func @_gemm_bn_kernel(%arg0: i32, %arg1: i32, %arg2: i32, %arg3: memref<512x256xbf16, #tpu.memory_space<vmem>>, %arg4: memref<256x128xbf16, #tpu.memory_space<vmem>>, %arg5: memref<1x128xf32, #tpu.memory_space<vmem>>, %arg6: memref<1x128xf32, #tpu.memory_space<vmem>>, %arg7: memref<512x128xbf16, #tpu.memory_space<vmem>>, %arg8: memref<512x128xf32, #tpu.memory_space<vmem>>) attributes {dimension_semantics = [#tpu.dimension_semantics<parallel>, #tpu.dimension_semantics<parallel>, #tpu.dimension_semantics<arbitrary>], iteration_bounds = array<i64: 1, 1, 1>, scalar_prefetch = 0 : i64, scratch_operands = 1 : i64, tpu.core_type = #tpu.core_type<tc>, window_params = [{transform_indices = @transform_0, window_bounds = array<i64: 512, 256>}, {transform_indices = @transform_1, window_bounds = array<i64: 256, 128>}, {transform_indices = @transform_2, window_bounds = array<i64: 1, 128>}, {transform_indices = @transform_3, window_bounds = array<i64: 1, 128>}, {transform_indices = @transform_4, window_bounds = array<i64: 512, 128>}]} {
    %c0_i32 = arith.constant 0 : i32
    %0 = arith.cmpi eq, %arg2, %c0_i32 : i32
    %1 = arith.extui %0 : i1 to i32
    %c0_i32_0 = arith.constant 0 : i32
    %2 = arith.cmpi ne, %1, %c0_i32_0 : i32
    scf.if %2 {
      %cst_10 = arith.constant 0.000000e+00 : f32
      %12 = vector.broadcast %cst_10 : f32 to vector<512x128xf32>
      %c0_11 = arith.constant 0 : index
      %c0_12 = arith.constant 0 : index
      %13 = vector.load %arg8[%c0_11, %c0_12] : memref<512x128xf32, #tpu.memory_space<vmem>>, vector<512x128xf32>
      tpu.vector_store %arg8[%c0_11, %c0_12], %12 {strides = array<i32>} : memref<512x128xf32, #tpu.memory_space<vmem>>, vector<512x128xf32>,
    } else {
    }
    %c0 = arith.constant 0 : index
    %c0_1 = arith.constant 0 : index
    %3 = vector.load %arg8[%c0, %c0_1] : memref<512x128xf32, #tpu.memory_space<vmem>>, vector<512x128xf32>
    %c0_2 = arith.constant 0 : index
    %c0_3 = arith.constant 0 : index
    %4 = vector.load %arg3[%c0_2, %c0_3] : memref<512x256xbf16, #tpu.memory_space<vmem>>, vector<512x256xbf16>
    %c0_4 = arith.constant 0 : index
    %c0_5 = arith.constant 0 : index
    %5 = vector.load %arg4[%c0_4, %c0_5] : memref<256x128xbf16, #tpu.memory_space<vmem>>, vector<256x128xbf16>
    %cst = arith.constant dense<0.000000e+00> : vector<512x128xf32>
    %6 = tpu.matmul %4, %5, %cst {dimension_numbers = #tpu.dot_dimension_numbers<[1], [0], [0], [1], [0, 0, 1, 1], [], []>} : vector<512x256xbf16>, vector<256x128xbf16>, vector<512x128xf32> -> vector<512x128xf32>
    %7 = arith.addf %3, %6 : vector<512x128xf32>
    %c0_6 = arith.constant 0 : index
    %c0_7 = arith.constant 0 : index
    %8 = vector.load %arg8[%c0_6, %c0_7] : memref<512x128xf32, #tpu.memory_space<vmem>>, vector<512x128xf32>
    tpu.vector_store %arg8[%c0_6, %c0_7], %7 {strides = array<i32>} : memref<512x128xf32, #tpu.memory_space<vmem>>, vector<512x128xf32>,
    %c0_i32_8 = arith.constant 0 : i32
    %9 = arith.cmpi eq, %arg2, %c0_i32_8 : i32
    %10 = arith.extui %9 : i1 to i32
    %c0_i32_9 = arith.constant 0 : i32
    %11 = arith.cmpi ne, %10, %c0_i32_9 : i32
    scf.if %11 {
      %c0_10 = arith.constant 0 : index
      %c0_11 = arith.constant 0 : index
      %12 = vector.load %arg8[%c0_10, %c0_11] : memref<512x128xf32, #tpu.memory_space<vmem>>, vector<512x128xf32>
      %c0_12 = arith.constant 0 : index
      %c0_13 = arith.constant 0 : index
      %13 = vector.load %arg5[%c0_12, %c0_13] : memref<1x128xf32, #tpu.memory_space<vmem>>, vector<1x128xf32>
      %14 = vector.broadcast %13 : vector<1x128xf32> to vector<512x128xf32>
      %15 = arith.mulf %12, %14 : vector<512x128xf32>
      %c0_14 = arith.constant 0 : index
      %c0_15 = arith.constant 0 : index
      %16 = vector.load %arg6[%c0_14, %c0_15] : memref<1x128xf32, #tpu.memory_space<vmem>>, vector<1x128xf32>
      %17 = vector.broadcast %16 : vector<1x128xf32> to vector<512x128xf32>
      %18 = arith.addf %15, %17 : vector<512x128xf32>
      %cst_16 = arith.constant 0.000000e+00 : f32
      %19 = vector.broadcast %cst_16 : f32 to vector<512x128xf32>
      %20 = arith.maximumf %18, %19 : vector<512x128xf32>
      %21 = arith.truncf %20 : vector<512x128xf32> to vector<512x128xbf16>
      %c0_17 = arith.constant 0 : index
      %c0_18 = arith.constant 0 : index
      %22 = vector.load %arg7[%c0_17, %c0_18] : memref<512x128xbf16, #tpu.memory_space<vmem>>, vector<512x128xbf16>
      tpu.vector_store %arg7[%c0_17, %c0_18], %21 {strides = array<i32>} : memref<512x128xbf16, #tpu.memory_space<vmem>>, vector<512x128xbf16>,
    } else {
    }
    return
  }
  func.func @transform_0(%arg0: i32, %arg1: i32, %arg2: i32) -> (i32, i32) {
    %c0_i32 = arith.constant 0 : i32
    return %arg0, %arg2 : i32, i32
  }
  func.func @transform_1(%arg0: i32, %arg1: i32, %arg2: i32) -> (i32, i32) {
    %c0_i32 = arith.constant 0 : i32
    return %arg2, %arg1 : i32, i32
  }
  func.func @transform_2(%arg0: i32, %arg1: i32, %arg2: i32) -> (i32, i32) {
    %c0_i32 = arith.constant 0 : i32
    %c0_i32_0 = arith.constant 0 : i32
    return %c0_i32, %arg1 : i32, i32
  }
  func.func @transform_3(%arg0: i32, %arg1: i32, %arg2: i32) -> (i32, i32) {
    %c0_i32 = arith.constant 0 : i32
    %c0_i32_0 = arith.constant 0 : i32
    return %c0_i32, %arg1 : i32, i32
  }
  func.func @transform_4(%arg0: i32, %arg1: i32, %arg2: i32) -> (i32, i32) {
    %c0_i32 = arith.constant 0 : i32
    return %arg0, %arg1 : i32, i32
  }
}

</mosaic_0001>

<llo_original>
// kernel: conv_im2col_bn.1
$region0: #{conv_im2col_bn.1}
  #allocation0 [shape = 'u32[]', space=smem, size = 0x4, offset = 0x4, fixed_abs, tag = 'smem constant byte address 0x4 - core index']
  #allocation1 [shape = 'u32[144,128]{1,0:T(1,128)}', space=vmem, size = 0x12000, scoped, tag = 'internal scratch']
  #allocation2 [shape = 'f32[512,128]{1,0:T(8,128)}', space=vmem, size = 0x40000, scoped, tag = 'scratch operand']
  %s0 = inlined_call_operand.vmem [shape: bf16[512,256], index: 0, kind: input, shape index: {}]
  %s1 = inlined_call_operand.vmem [shape: bf16[256,128], index: 1, kind: input, shape index: {}]
  %s2 = inlined_call_operand.vmem [shape: f32[1,128], index: 2, kind: input, shape index: {}]
  %s3 = inlined_call_operand.vmem [shape: f32[1,128], index: 3, kind: input, shape index: {}]
  %s4 = inlined_call_operand.hbm [shape: bf16[512,128], index: 4, kind: output, shape index: {}]
  %s5 = sld [smem:[#allocation0]]
  $region34: #{conv_im2col_bn.1} parent=0
    _
  %s7 = ssub.s32 1, %s5
  %s8 = scalar_select 0, %s7, %s5
  $region1: #{conv_im2col_bn.1} parent=0
    #allocation3 [shape = 'u8[131072]{0}', space=vmem, size = 0x20000, scoped, tag = 'output window, operand 0, single buffered']
    #allocation4 [shape = 's32[1]{0}', space=sflag, size = 0x4, scoped, tag = 'scoped memory for conv_im2col_bn.1']
    %9 = vsyncpa [#allocation4], 0
    // Predicated region
    $region2: #{conv_im2col_bn.1} parent=1 // pred_check
      _
    $region3: #{conv_im2col_bn.1} parent=1 // pred_check_branch
      %11 = sbr.rel (0) target = $region5
    $region4: #{conv_im2col_bn.1} parent=1 // pred_region
      _
    $region5: #{conv_im2col_bn.1} parent=1 // pred_fallthru
      _
    // Predicated region
    $region6: #{conv_im2col_bn.1} parent=1 // pred_check
      _
    $region7: #{conv_im2col_bn.1} parent=1 // pred_check_branch
      %13 = sbr.rel (0) target = $region9
    $region8: #{conv_im2col_bn.1} parent=1 // pred_region
      _
    $region9: #{conv_im2col_bn.1} parent=1 // pred_fallthru
      _
    // Predicated region
    $region10: #{conv_im2col_bn.1} parent=1 // pred_check
      _
    $region11: #{conv_im2col_bn.1} parent=1 // pred_check_branch
      %15 = sbr.rel (0) target = $region13
    $region12: #{conv_im2col_bn.1} parent=1 // pred_region
      _
    $region13: #{conv_im2col_bn.1} parent=1 // pred_fallthru
      _
    // Predicated region
    $region14: #{conv_im2col_bn.1} parent=1 // pred_check
      _
    $region15: #{conv_im2col_bn.1} parent=1 // pred_check_branch
      %17 = sbr.rel (0) target = $region17
    $region16: #{conv_im2col_bn.1} parent=1 // pred_region
      _
    $region17: #{conv_im2col_bn.1} parent=1 // pred_fallthru
      _
    %p19 = scmp.eq.s32.totalorder 0, 0
    // Predicated region
    $region18: #{conv_im2col_bn.1} parent=1 // pred_check
      %p20 = pneg %p19
    $region19: #{conv_im2col_bn.1} parent=1 // pred_check_branch
      %22 = sbr.rel (%p20) target = $region21
    $region20: #{conv_im2col_bn.1} parent=1 // pred_region
      %23 = vst [vmem:[#allocation2] sm:$0xff] 0.0
      %24 = vst [vmem:[#allocation2 + $0x8] sm:$0xff] 0.0
      %25 = vst [vmem:[#allocation2 + $0x10] sm:$0xff] 0.0
      %26 = vst [vmem:[#allocation2 + $0x18] sm:$0xff] 0.0
      %27 = vst [vmem:[#allocation2 + $0x20] sm:$0xff] 0.0
      %28 = vst [vmem:[#allocation2 + $0x28] sm:$0xff] 0.0
      %29 = vst [vmem:[#allocation2 + $0x30] sm:$0xff] 0.0
      %30 = vst [vmem:[#allocation2 + $0x38] sm:$0xff] 0.0
      %31 = vst [vmem:[#allocation2 + $0x40] sm:$0xff] 0.0
      %32 = vst [vmem:[#allocation2 + $0x48] sm:$0xff] 0.0
      %33 = vst [vmem:[#allocation2 + $0x50] sm:$0xff] 0.0
      %34 = vst [vmem:[#allocation2 + $0x58] sm:$0xff] 0.0
      %35 = vst [vmem:[#allocation2 + $0x60] sm:$0xff] 0.0
      %36 = vst [vmem:[#allocation2 + $0x68] sm:$0xff] 0.0
      %37 = vst [vmem:[#allocation2 + $0x70] sm:$0xff] 0.0
      %38 = vst [vmem:[#allocation2 + $0x78] sm:$0xff] 0.0
      %39 = vst [vmem:[#allocation2 + $0x80] sm:$0xff] 0.0
      %40 = vst [vmem:[#allocation2 + $0x88] sm:$0xff] 0.0
      %41 = vst [vmem:[#allocation2 + $0x90] sm:$0xff] 0.0
      %42 = vst [vmem:[#allocation2 + $0x98] sm:$0xff] 0.0
      %43 = vst [vmem:[#allocation2 + $0xa0] sm:$0xff] 0.0
      %44 = vst [vmem:[#allocation2 + $0xa8] sm:$0xff] 0.0
      %45 = vst [vmem:[#allocation2 + $0xb0] sm:$0xff] 0.0
      %46 = vst [vmem:[#allocation2 + $0xb8] sm:$0xff] 0.0
      %47 = vst [vmem:[#allocation2 + $0xc0] sm:$0xff] 0.0
      %48 = vst [vmem:[#allocation2 + $0xc8] sm:$0xff] 0.0
      %49 = vst [vmem:[#allocation2 + $0xd0] sm:$0xff] 0.0
      %50 = vst [vmem:[#allocation2 + $0xd8] sm:$0xff] 0.0
      %51 = vst [vmem:[#allocation2 + $0xe0] sm:$0xff] 0.0
      %52 = vst [vmem:[#allocation2 + $0xe8] sm:$0xff] 0.0
      %53 = vst [vmem:[#allocation2 + $0xf0] sm:$0xff] 0.0
      %54 = vst [vmem:[#allocation2 + $0xf8] sm:$0xff] 0.0
      %55 = vst [vmem:[#allocation2 + $0x100] sm:$0xff] 0.0
      %56 = vst [vmem:[#allocation2 + $0x108] sm:$0xff] 0.0
      %57 = vst [vmem:[#allocation2 + $0x110] sm:$0xff] 0.0
      %58 = vst [vmem:[#allocation2 + $0x118] sm:$0xff] 0.0
      %59 = vst [vmem:[#allocation2 + $0x120] sm:$0xff] 0.0
      %60 = vst [vmem:[#allocation2 + $0x128] sm:$0xff] 0.0
      %61 = vst [vmem:[#allocation2 + $0x130] sm:$0xff] 0.0
      %62 = vst [vmem:[#allocation2 + $0x138] sm:$0xff] 0.0
      %63 = vst [vmem:[#allocation2 + $0x140] sm:$0xff] 0.0
      %64 = vst [vmem:[#allocation2 + $0x148] sm:$0xff] 0.0
      %65 = vst [vmem:[#allocation2 + $0x150] sm:$0xff] 0.0
      %66 = vst [vmem:[#allocation2 + $0x158] sm:$0xff] 0.0
      %67 = vst [vmem:[#allocation2 + $0x160] sm:$0xff] 0.0
      %68 = vst [vmem:[#allocation2 + $0x168] sm:$0xff] 0.0
      %69 = vst [vmem:[#allocation2 + $0x170] sm:$0xff] 0.0
      %70 = vst [vmem:[#allocation2 + $0x178] sm:$0xff] 0.0
      %71 = vst [vmem:[#allocation2 + $0x180] sm:$0xff] 0.0
      %72 = vst [vmem:[#allocation2 + $0x188] sm:$0xff] 0.0
      %73 = vst [vmem:[#allocation2 + $0x190] sm:$0xff] 0.0
      %74 = vst [vmem:[#allocation2 + $0x198] sm:$0xff] 0.0
      %75 = vst [vmem:[#allocation2 + $0x1a0] sm:$0xff] 0.0
      %76 = vst [vmem:[#allocation2 + $0x1a8] sm:$0xff] 0.0
      %77 = vst [vmem:[#allocation2 + $0x1b0] sm:$0xff] 0.0
      %78 = vst [vmem:[#allocation2 + $0x1b8] sm:$0xff] 0.0
      %79 = vst [vmem:[#allocation2 + $0x1c0] sm:$0xff] 0.0
      %80 = vst [vmem:[#allocation2 + $0x1c8] sm:$0xff] 0.0
      %81 = vst [vmem:[#allocation2 + $0x1d0] sm:$0xff] 0.0
      %82 = vst [vmem:[#allocation2 + $0x1d8] sm:$0xff] 0.0
      %83 = vst [vmem:[#allocation2 + $0x1e0] sm:$0xff] 0.0
      %84 = vst [vmem:[#allocation2 + $0x1e8] sm:$0xff] 0.0
      %85 = vst [vmem:[#allocation2 + $0x1f0] sm:$0xff] 0.0
      %86 = vst [vmem:[#allocation2 + $0x1f8] sm:$0xff] 0.0
    $region21: #{conv_im2col_bn.1} parent=1 // pred_fallthru
      _
    %v87 = vld [vmem:[#allocation2] sm:$0xff]
    %v88 = vld [vmem:[#allocation2 + $0x8] sm:$0xff]
    %v89 = vld [vmem:[#allocation2 + $0x10] sm:$0xff]
    %v90 = vld [vmem:[#allocation2 + $0x18] sm:$0xff]
    %v91 = vld [vmem:[#allocation2 + $0x20] sm:$0xff]
    %v92 = vld [vmem:[#allocation2 + $0x28] sm:$0xff]
    %v93 = vld [vmem:[#allocation2 + $0x30] sm:$0xff]
    %v94 = vld [vmem:[#allocation2 + $0x38] sm:$0xff]
    %v95 = vld [vmem:[#allocation2 + $0x40] sm:$0xff]
    %v96 = vld [vmem:[#allocation2 + $0x48] sm:$0xff]
    %v97 = vld [vmem:[#allocation2 + $0x50] sm:$0xff]
    %v98 = vld [vmem:[#allocation2 + $0x58] sm:$0xff]
    %v99 = vld [vmem:[#allocation2 + $0x60] sm:$0xff]
    %v100 = vld [vmem:[#allocation2 + $0x68] sm:$0xff]
    %v101 = vld [vmem:[#allocation2 + $0x70] sm:$0xff]
    %v102 = vld [vmem:[#allocation2 + $0x78] sm:$0xff]
    %v103 = vld [vmem:[#allocation2 + $0x80] sm:$0xff]
    %v104 = vld [vmem:[#allocation2 + $0x88] sm:$0xff]
    %v105 = vld [vmem:[#allocation2 + $0x90] sm:$0xff]
    %v106 = vld [vmem:[#allocation2 + $0x98] sm:$0xff]
    %v107 = vld [vmem:[#allocation2 + $0xa0] sm:$0xff]
    %v108 = vld [vmem:[#allocation2 + $0xa8] sm:$0xff]
    %v109 = vld [vmem:[#allocation2 + $0xb0] sm:$0xff]
    %v110 = vld [vmem:[#allocation2 + $0xb8] sm:$0xff]
    %v111 = vld [vmem:[#allocation2 + $0xc0] sm:$0xff]
    %v112 = vld [vmem:[#allocation2 + $0xc8] sm:$0xff]
    %v113 = vld [vmem:[#allocation2 + $0xd0] sm:$0xff]
    %v114 = vld [vmem:[#allocation2 + $0xd8] sm:$0xff]
    %v115 = vld [vmem:[#allocation2 + $0xe0] sm:$0xff]
    %v116 = vld [vmem:[#allocation2 + $0xe8] sm:$0xff]
    %v117 = vld [vmem:[#allocation2 + $0xf0] sm:$0xff]
    %v118 = vld [vmem:[#allocation2 + $0xf8] sm:$0xff]
    %v119 = vld [vmem:[#allocation2 + $0x100] sm:$0xff]
    %v120 = vld [vmem:[#allocation2 + $0x108] sm:$0xff]
    %v121 = vld [vmem:[#allocation2 + $0x110] sm:$0xff]
    %v122 = vld [vmem:[#allocation2 + $0x118] sm:$0xff]
    %v123 = vld [vmem:[#allocation2 + $0x120] sm:$0xff]
    %v124 = vld [vmem:[#allocation2 + $0x128] sm:$0xff]
    %v125 = vld [vmem:[#allocation2 + $0x130] sm:$0xff]
    %v126 = vld [vmem:[#allocation2 + $0x138] sm:$0xff]
    %v127 = vld [vmem:[#allocation2 + $0x140] sm:$0xff]
    %v128 = vld [vmem:[#allocation2 + $0x148] sm:$0xff]
    %v129 = vld [vmem:[#allocation2 + $0x150] sm:$0xff]
    %v130 = vld [vmem:[#allocation2 + $0x158] sm:$0xff]
    %v131 = vld [vmem:[#allocation2 + $0x160] sm:$0xff]
    %v132 = vld [vmem:[#allocation2 + $0x168] sm:$0xff]
    %v133 = vld [vmem:[#allocation2 + $0x170] sm:$0xff]
    %v134 = vld [vmem:[#allocation2 + $0x178] sm:$0xff]
    %v135 = vld [vmem:[#allocation2 + $0x180] sm:$0xff]
    %v136 = vld [vmem:[#allocation2 + $0x188] sm:$0xff]
    %v137 = vld [vmem:[#allocation2 + $0x190] sm:$0xff]
    %v138 = vld [vmem:[#allocation2 + $0x198] sm:$0xff]
    %v139 = vld [vmem:[#allocation2 + $0x1a0] sm:$0xff]
    %v140 = vld [vmem:[#allocation2 + $0x1a8] sm:$0xff]
    %v141 = vld [vmem:[#allocation2 + $0x1b0] sm:$0xff]
    %v142 = vld [vmem:[#allocation2 + $0x1b8] sm:$0xff]
    %v143 = vld [vmem:[#allocation2 + $0x1c0] sm:$0xff]
    %v144 = vld [vmem:[#allocation2 + $0x1c8] sm:$0xff]
    %v145 = vld [vmem:[#allocation2 + $0x1d0] sm:$0xff]
    %v146 = vld [vmem:[#allocation2 + $0x1d8] sm:$0xff]
    %v147 = vld [vmem:[#allocation2 + $0x1e0] sm:$0xff]
    %v148 = vld [vmem:[#allocation2 + $0x1e8] sm:$0xff]
    %v149 = vld [vmem:[#allocation2 + $0x1f0] sm:$0xff]
    %v150 = vld [vmem:[#allocation2 + $0x1f8] sm:$0xff]
    %v151 = vld [vmem:[%s0] sm:$0xff]
    %v152 = vld [vmem:[%s0 + $0x8] sm:$0xff]
    %v153 = vld [vmem:[%s0 + $0x10] sm:$0xff]
    %v154 = vld [vmem:[%s0 + $0x18] sm:$0xff]
    %v155 = vld [vmem:[%s0 + $0x20] sm:$0xff]
    %v156 = vld [vmem:[%s0 + $0x28] sm:$0xff]
    %v157 = vld [vmem:[%s0 + $0x30] sm:$0xff]
    %v158 = vld [vmem:[%s0 + $0x38] sm:$0xff]
    %v159 = vld [vmem:[%s0 + $0x40] sm:$0xff]
    %v160 = vld [vmem:[%s0 + $0x48] sm:$0xff]
    %v161 = vld [vmem:[%s0 + $0x50] sm:$0xff]
    %v162 = vld [vmem:[%s0 + $0x58] sm:$0xff]
    %v163 = vld [vmem:[%s0 + $0x60] sm:$0xff]
    %v164 = vld [vmem:[%s0 + $0x68] sm:$0xff]
    %v165 = vld [vmem:[%s0 + $0x70] sm:$0xff]
    %v166 = vld [vmem:[%s0 + $0x78] sm:$0xff]
    %v167 = vld [vmem:[%s0 + $0x80] sm:$0xff]
    %v168 = vld [vmem:[%s0 + $0x88] sm:$0xff]
    %v169 = vld [vmem:[%s0 + $0x90] sm:$0xff]
    %v170 = vld [vmem:[%s0 + $0x98] sm:$0xff]
    %v171 = vld [vmem:[%s0 + $0xa0] sm:$0xff]
    %v172 = vld [vmem:[%s0 + $0xa8] sm:$0xff]
    %v173 = vld [vmem:[%s0 + $0xb0] sm:$0xff]
    %v174 = vld [vmem:[%s0 + $0xb8] sm:$0xff]
    %v175 = vld [vmem:[%s0 + $0xc0] sm:$0xff]
    %v176 = vld [vmem:[%s0 + $0xc8] sm:$0xff]
    %v177 = vld [vmem:[%s0 + $0xd0] sm:$0xff]
    %v178 = vld [vmem:[%s0 + $0xd8] sm:$0xff]
    %v179 = vld [vmem:[%s0 + $0xe0] sm:$0xff]
    %v180 = vld [vmem:[%s0 + $0xe8] sm:$0xff]
    %v181 = vld [vmem:[%s0 + $0xf0] sm:$0xff]
    %v182 = vld [vmem:[%s0 + $0xf8] sm:$0xff]
    %v183 = vld [vmem:[%s0 + $0x100] sm:$0xff]
    %v184 = vld [vmem:[%s0 + $0x108] sm:$0xff]
    %v185 = vld [vmem:[%s0 + $0x110] sm:$0xff]
    %v186 = vld [vmem:[%s0 + $0x118] sm:$0xff]
    %v187 = vld [vmem:[%s0 + $0x120] sm:$0xff]
    %v188 = vld [vmem:[%s0 + $0x128] sm:$0xff]
    %v189 = vld [vmem:[%s0 + $0x130] sm:$0xff]
    %v190 = vld [vmem:[%s0 + $0x138] sm:$0xff]
    %v191 = vld [vmem:[%s0 + $0x140] sm:$0xff]
    %v192 = vld [vmem:[%s0 + $0x148] sm:$0xff]
    %v193 = vld [vmem:[%s0 + $0x150] sm:$0xff]
    %v194 = vld [vmem:[%s0 + $0x158] sm:$0xff]
    %v195 = vld [vmem:[%s0 + $0x160] sm:$0xff]
    %v196 = vld [vmem:[%s0 + $0x168] sm:$0xff]
    %v197 = vld [vmem:[%s0 + $0x170] sm:$0xff]
    %v198 = vld [vmem:[%s0 + $0x178] sm:$0xff]
    %v199 = vld [vmem:[%s0 + $0x180] sm:$0xff]
    %v200 = vld [vmem:[%s0 + $0x188] sm:$0xff]
    %v201 = vld [vmem:[%s0 + $0x190] sm:$0xff]
    %v202 = vld [vmem:[%s0 + $0x198] sm:$0xff]
    %v203 = vld [vmem:[%s0 + $0x1a0] sm:$0xff]
    %v204 = vld [vmem:[%s0 + $0x1a8] sm:$0xff]
    %v205 = vld [vmem:[%s0 + $0x1b0] sm:$0xff]
    %v206 = vld [vmem:[%s0 + $0x1b8] sm:$0xff]
    %v207 = vld [vmem:[%s0 + $0x1c0] sm:$0xff]
    %v208 = vld [vmem:[%s0 + $0x1c8] sm:$0xff]
    %v209 = vld [vmem:[%s0 + $0x1d0] sm:$0xff]
    %v210 = vld [vmem:[%s0 + $0x1d8] sm:$0xff]
    %v211 = vld [vmem:[%s0 + $0x1e0] sm:$0xff]
    %v212 = vld [vmem:[%s0 + $0x1e8] sm:$0xff]
    %v213 = vld [vmem:[%s0 + $0x1f0] sm:$0xff]
    %v214 = vld [vmem:[%s0 + $0x1f8] sm:$0xff]
    %v215 = vld [vmem:[%s1] sm:$0xf]
    %v216 = vld [vmem:[%s1 + $0x4] sm:$0xf]
    %v217 = vld [vmem:[%s1 + $0x8] sm:$0xf]
    %v218 = vld [vmem:[%s1 + $0xc] sm:$0xf]
    %v219 = vld [vmem:[%s1 + $0x10] sm:$0xf]
    %v220 = vld [vmem:[%s1 + $0x14] sm:$0xf]
    %v221 = vld [vmem:[%s1 + $0x18] sm:$0xf]
    %v222 = vld [vmem:[%s1 + $0x1c] sm:$0xf]
    %v223 = vld [vmem:[%s1 + $0x20] sm:$0xf]
    %v224 = vld [vmem:[%s1 + $0x24] sm:$0xf]
    %v225 = vld [vmem:[%s1 + $0x28] sm:$0xf]
    %v226 = vld [vmem:[%s1 + $0x2c] sm:$0xf]
    %v227 = vld [vmem:[%s1 + $0x30] sm:$0xf]
    %v228 = vld [vmem:[%s1 + $0x34] sm:$0xf]
    %v229 = vld [vmem:[%s1 + $0x38] sm:$0xf]
    %v230 = vld [vmem:[%s1 + $0x3c] sm:$0xf]
    %v231 = vld [vmem:[%s1 + $0x40] sm:$0xf]
    %v232 = vld [vmem:[%s1 + $0x44] sm:$0xf]
    %v233 = vld [vmem:[%s1 + $0x48] sm:$0xf]
    %v234 = vld [vmem:[%s1 + $0x4c] sm:$0xf]
    %v235 = vld [vmem:[%s1 + $0x50] sm:$0xf]
    %v236 = vld [vmem:[%s1 + $0x54] sm:$0xf]
    %v237 = vld [vmem:[%s1 + $0x58] sm:$0xf]
    %v238 = vld [vmem:[%s1 + $0x5c] sm:$0xf]
    %v239 = vld [vmem:[%s1 + $0x60] sm:$0xf]
    %v240 = vld [vmem:[%s1 + $0x64] sm:$0xf]
    %v241 = vld [vmem:[%s1 + $0x68] sm:$0xf]
    %v242 = vld [vmem:[%s1 + $0x6c] sm:$0xf]
    %v243 = vld [vmem:[%s1 + $0x70] sm:$0xf]
    %v244 = vld [vmem:[%s1 + $0x74] sm:$0xf]
    %v245 = vld [vmem:[%s1 + $0x78] sm:$0xf]
    %v246 = vld [vmem:[%s1 + $0x7c] sm:$0xf]
    %v311 = vunpack.c.l.b16 %v151
    %v312 = vunpack.c.h.b16 %v151
    %v313 = vunpack.c.l.b16 %v152
    %v314 = vunpack.c.h.b16 %v152
    %v315 = vunpack.c.l.b16 %v153
    %v316 = vunpack.c.h.b16 %v153
    %v317 = vunpack.c.l.b16 %v154
    %v318 = vunpack.c.h.b16 %v154
    %v319 = vunpack.c.l.b16 %v155
    %v320 = vunpack.c.h.b16 %v155
    %v321 = vunpack.c.l.b16 %v156
    %v322 = vunpack.c.h.b16 %v156
    %v323 = vunpack.c.l.b16 %v157
    %v324 = vunpack.c.h.b16 %v157
    %v325 = vunpack.c.l.b16 %v158
    %v326 = vunpack.c.h.b16 %v158
    %v327 = vunpack.c.l.b16 %v159
    %v328 = vunpack.c.h.b16 %v159
    %v329 = vunpack.c.l.b16 %v160
    %v330 = vunpack.c.h.b16 %v160
    %v331 = vunpack.c.l.b16 %v161
    %v332 = vunpack.c.h.b16 %v161
    %v333 = vunpack.c.l.b16 %v162
    %v334 = vunpack.c.h.b16 %v162
    %v335 = vunpack.c.l.b16 %v163
    %v336 = vunpack.c.h.b16 %v163
    %v337 = vunpack.c.l.b16 %v164
    %v338 = vunpack.c.h.b16 %v164
    %v339 = vunpack.c.l.b16 %v165
    %v340 = vunpack.c.h.b16 %v165
    %v341 = vunpack.c.l.b16 %v166
    %v342 = vunpack.c.h.b16 %v166
    %v343 = vunpack.c.l.b16 %v167
    %v344 = vunpack.c.h.b16 %v167
    %v345 = vunpack.c.l.b16 %v168
    %v346 = vunpack.c.h.b16 %v168
    %v347 = vunpack.c.l.b16 %v169
    %v348 = vunpack.c.h.b16 %v169
    %v349 = vunpack.c.l.b16 %v170
    %v350 = vunpack.c.h.b16 %v170
    %v351 = vunpack.c.l.b16 %v171
    %v352 = vunpack.c.h.b16 %v171
    %v353 = vunpack.c.l.b16 %v172
    %v354 = vunpack.c.h.b16 %v172
    %v355 = vunpack.c.l.b16 %v173
    %v356 = vunpack.c.h.b16 %v173
    %v357 = vunpack.c.l.b16 %v174
    %v358 = vunpack.c.h.b16 %v174
    %v359 = vunpack.c.l.b16 %v175
    %v360 = vunpack.c.h.b16 %v175
    %v361 = vunpack.c.l.b16 %v176
    %v362 = vunpack.c.h.b16 %v176
    %v363 = vunpack.c.l.b16 %v177
    %v364 = vunpack.c.h.b16 %v177
    %v365 = vunpack.c.l.b16 %v178
    %v366 = vunpack.c.h.b16 %v178
    %v367 = vunpack.c.l.b16 %v179
    %v368 = vunpack.c.h.b16 %v179
    %v369 = vunpack.c.l.b16 %v180
    %v370 = vunpack.c.h.b16 %v180
    %v371 = vunpack.c.l.b16 %v181
    %v372 = vunpack.c.h.b16 %v181
    %v373 = vunpack.c.l.b16 %v182
    %v374 = vunpack.c.h.b16 %v182
    %v375 = vunpack.c.l.b16 %v183
    %v376 = vunpack.c.h.b16 %v183
    %v377 = vunpack.c.l.b16 %v184
    %v378 = vunpack.c.h.b16 %v184
    %v379 = vunpack.c.l.b16 %v185
    %v380 = vunpack.c.h.b16 %v185
    %v381 = vunpack.c.l.b16 %v186
    %v382 = vunpack.c.h.b16 %v186
    %v383 = vunpack.c.l.b16 %v187
    %v384 = vunpack.c.h.b16 %v187
    %v385 = vunpack.c.l.b16 %v188
    %v386 = vunpack.c.h.b16 %v188
    %v387 = vunpack.c.l.b16 %v189
    %v388 = vunpack.c.h.b16 %v189
    %v389 = vunpack.c.l.b16 %v190
    %v390 = vunpack.c.h.b16 %v190
    %v391 = vunpack.c.l.b16 %v191
    %v392 = vunpack.c.h.b16 %v191
    %v393 = vunpack.c.l.b16 %v192
    %v394 = vunpack.c.h.b16 %v192
    %v395 = vunpack.c.l.b16 %v193
    %v396 = vunpack.c.h.b16 %v193
    %v397 = vunpack.c.l.b16 %v194
    %v398 = vunpack.c.h.b16 %v194
    %v399 = vunpack.c.l.b16 %v195
    %v400 = vunpack.c.h.b16 %v195
    %v401 = vunpack.c.l.b16 %v196
    %v402 = vunpack.c.h.b16 %v196
    %v403 = vunpack.c.l.b16 %v197
    %v404 = vunpack.c.h.b16 %v197
    %v405 = vunpack.c.l.b16 %v198
    %v406 = vunpack.c.h.b16 %v198
    %v407 = vunpack.c.l.b16 %v199
    %v408 = vunpack.c.h.b16 %v199
    %v409 = vunpack.c.l.b16 %v200
    %v410 = vunpack.c.h.b16 %v200
    %v411 = vunpack.c.l.b16 %v201
    %v412 = vunpack.c.h.b16 %v201
    %v413 = vunpack.c.l.b16 %v202
    %v414 = vunpack.c.h.b16 %v202
    %v415 = vunpack.c.l.b16 %v203
    %v416 = vunpack.c.h.b16 %v203
    %v417 = vunpack.c.l.b16 %v204
    %v418 = vunpack.c.h.b16 %v204
    %v419 = vunpack.c.l.b16 %v205
    %v420 = vunpack.c.h.b16 %v205
    %v421 = vunpack.c.l.b16 %v206
    %v422 = vunpack.c.h.b16 %v206
    %v423 = vunpack.c.l.b16 %v207
    %v424 = vunpack.c.h.b16 %v207
    %v425 = vunpack.c.l.b16 %v208
    %v426 = vunpack.c.h.b16 %v208
    %v427 = vunpack.c.l.b16 %v209
    %v428 = vunpack.c.h.b16 %v209
    %v429 = vunpack.c.l.b16 %v210
    %v430 = vunpack.c.h.b16 %v210
    %v431 = vunpack.c.l.b16 %v211
    %v432 = vunpack.c.h.b16 %v211
    %v433 = vunpack.c.l.b16 %v212
    %v434 = vunpack.c.h.b16 %v212
    %v435 = vunpack.c.l.b16 %v213
    %v436 = vunpack.c.h.b16 %v213
    %v437 = vunpack.c.l.b16 %v214
    %v438 = vunpack.c.h.b16 %v214
    %v439 = vpack.c.b16 %v313, %v311
    %v440 = vpack.c.b16 %v314, %v312
    %v441 = vpack.c.b16 %v317, %v315
    %v442 = vpack.c.b16 %v318, %v316
    %v443 = vpack.c.b16 %v321, %v319
    %v444 = vpack.c.b16 %v322, %v320
    %v445 = vpack.c.b16 %v325, %v323
    %v446 = vpack.c.b16 %v326, %v324
    %v447 = vpack.c.b16 %v329, %v327
    %v448 = vpack.c.b16 %v330, %v328
    %v449 = vpack.c.b16 %v333, %v331
    %v450 = vpack.c.b16 %v334, %v332
    %v451 = vpack.c.b16 %v337, %v335
    %v452 = vpack.c.b16 %v338, %v336
    %v453 = vpack.c.b16 %v341, %v339
    %v454 = vpack.c.b16 %v342, %v340
    %v455 = vpack.c.b16 %v345, %v343
    %v456 = vpack.c.b16 %v346, %v344
    %v457 = vpack.c.b16 %v349, %v347
    %v458 = vpack.c.b16 %v350, %v348
    %v459 = vpack.c.b16 %v353, %v351
    %v460 = vpack.c.b16 %v354, %v352
    %v461 = vpack.c.b16 %v357, %v355
    %v462 = vpack.c.b16 %v358, %v356
    %v463 = vpack.c.b16 %v361, %v359
    %v464 = vpack.c.b16 %v362, %v360
    %v465 = vpack.c.b16 %v365, %v363
    %v466 = vpack.c.b16 %v366, %v364
    %v467 = vpack.c.b16 %v369, %v367
    %v468 = vpack.c.b16 %v370, %v368
    %v469 = vpack.c.b16 %v373, %v371
    %v470 = vpack.c.b16 %v374, %v372
    %v471 = vpack.c.b16 %v377, %v375
    %v472 = vpack.c.b16 %v378, %v376
    %v473 = vpack.c.b16 %v381, %v379
    %v474 = vpack.c.b16 %v382, %v380
    %v475 = vpack.c.b16 %v385, %v383
    %v476 = vpack.c.b16 %v386, %v384
    %v477 = vpack.c.b16 %v389, %v387
    %v478 = vpack.c.b16 %v390, %v388
    %v479 = vpack.c.b16 %v393, %v391
    %v480 = vpack.c.b16 %v394, %v392
    %v481 = vpack.c.b16 %v397, %v395
    %v482 = vpack.c.b16 %v398, %v396
    %v483 = vpack.c.b16 %v401, %v399
    %v484 = vpack.c.b16 %v402, %v400
    %v485 = vpack.c.b16 %v405, %v403
    %v486 = vpack.c.b16 %v406, %v404
    %v487 = vpack.c.b16 %v409, %v407
    %v488 = vpack.c.b16 %v410, %v408
    %v489 = vpack.c.b16 %v413, %v411
    %v490 = vpack.c.b16 %v414, %v412
    %v491 = vpack.c.b16 %v417, %v415
    %v492 = vpack.c.b16 %v418, %v416
    %v493 = vpack.c.b16 %v421, %v419
    %v494 = vpack.c.b16 %v422, %v420
    %v495 = vpack.c.b16 %v425, %v423
    %v496 = vpack.c.b16 %v426, %v424
    %v497 = vpack.c.b16 %v429, %v427
    %v498 = vpack.c.b16 %v430, %v428
    %v499 = vpack.c.b16 %v433, %v431
    %v500 = vpack.c.b16 %v434, %v432
    %v501 = vpack.c.b16 %v437, %v435
    %v502 = vpack.c.b16 %v438, %v436
    %v599 = vunpack.c.l.b16 %v215
    %v600 = vunpack.c.l.b16 %v216
    %v601 = vunpack.c.l.b16 %v217
    %v602 = vunpack.c.l.b16 %v218
    %v603 = vunpack.c.l.b16 %v219
    %v604 = vunpack.c.l.b16 %v220
    %v605 = vunpack.c.l.b16 %v221
    %v606 = vunpack.c.l.b16 %v222
    %v607 = vunpack.c.l.b16 %v223
    %v608 = vunpack.c.l.b16 %v224
    %v609 = vunpack.c.l.b16 %v225
    %v610 = vunpack.c.l.b16 %v226
    %v611 = vunpack.c.l.b16 %v227
    %v612 = vunpack.c.l.b16 %v228
    %v613 = vunpack.c.l.b16 %v229
    %v614 = vunpack.c.l.b16 %v230
    %v615 = vunpack.c.l.b16 %v231
    %v616 = vunpack.c.l.b16 %v232
    %v617 = vunpack.c.l.b16 %v233
    %v618 = vunpack.c.l.b16 %v234
    %v619 = vunpack.c.l.b16 %v235
    %v620 = vunpack.c.l.b16 %v236
    %v621 = vunpack.c.l.b16 %v237
    %v622 = vunpack.c.l.b16 %v238
    %v623 = vunpack.c.l.b16 %v239
    %v624 = vunpack.c.l.b16 %v240
    %v625 = vunpack.c.l.b16 %v241
    %v626 = vunpack.c.l.b16 %v242
    %v627 = vunpack.c.l.b16 %v243
    %v628 = vunpack.c.l.b16 %v244
    %v629 = vunpack.c.l.b16 %v245
    %v630 = vunpack.c.l.b16 %v246
    %v631 = vpack.c.b16 %v600, %v599
    %v632 = vpack.c.b16 %v602, %v601
    %v633 = vpack.c.b16 %v604, %v603
    %v634 = vpack.c.b16 %v606, %v605
    %v635 = vpack.c.b16 %v608, %v607
    %v636 = vpack.c.b16 %v610, %v609
    %v637 = vpack.c.b16 %v612, %v611
    %v638 = vpack.c.b16 %v614, %v613
    %v639 = vpack.c.b16 %v616, %v615
    %v640 = vpack.c.b16 %v618, %v617
    %v641 = vpack.c.b16 %v620, %v619
    %v642 = vpack.c.b16 %v622, %v621
    %v643 = vpack.c.b16 %v624, %v623
    %v644 = vpack.c.b16 %v626, %v625
    %v645 = vpack.c.b16 %v628, %v627
    %v646 = vpack.c.b16 %v630, %v629
    %663 = vmatprep.subr.bf16.mxu0 0
    %664 = vmatpush1.bf16.msra.mxu0 %v631
    %665 = vmatprep.subr.bf16.mxu0 0
    %666 = vmatpush1.bf16.msra.mxu0 %v632
    %667 = vmatprep.subr.bf16.mxu0 0
    %668 = vmatpush1.bf16.msra.mxu0 %v633
    %669 = vmatprep.subr.bf16.mxu0 0
    %670 = vmatpush1.bf16.msra.mxu0 %v634
    %671 = vmatprep.subr.bf16.mxu0 0
    %672 = vmatpush1.bf16.msra.mxu0 %v635
    %673 = vmatprep.subr.bf16.mxu0 0
    %674 = vmatpush1.bf16.msra.mxu0 %v636
    %675 = vmatprep.subr.bf16.mxu0 0
    %676 = vmatpush1.bf16.msra.mxu0 %v637
    %677 = vmatprep.subr.bf16.mxu0 0
    %678 = vmatpush1.bf16.msra.mxu0 %v638
    %679 = vmatprep.subr.bf16.mxu0 0
    %680 = vmatpush1.bf16.msra.mxu0 %v639
    %681 = vmatprep.subr.bf16.mxu0 0
    %682 = vmatpush1.bf16.msra.mxu0 %v640
    %683 = vmatprep.subr.bf16.mxu0 0
    %684 = vmatpush1.bf16.msra.mxu0 %v641
    %685 = vmatprep.subr.bf16.mxu0 0
    %686 = vmatpush1.bf16.msra.mxu0 %v642
    %687 = vmatprep.subr.bf16.mxu0 0
    %688 = vmatpush1.bf16.msra.mxu0 %v643
    %689 = vmatprep.subr.bf16.mxu0 0
    %690 = vmatpush1.bf16.msra.mxu0 %v644
    %691 = vmatprep.subr.bf16.mxu0 0
    %692 = vmatpush1.bf16.msra.mxu0 %v645
    %693 = vmatprep.subr.bf16.mxu0 0
    %694 = vmatpush1.bf16.msra.mxu0 %v646
    %695 = vmatprep.mubr.bf16.mxu0 %v440
    %696 = vmatmul.mubr.bf16.gmra.mrb[0].mxu0 %v439
    %v697 = vpop.f32.mrb[0].mxu0
    %v698 = vadd.f32 0.0, %v697
    %v699 = vpop.f32.mrb[0].mxu0
    %v700 = vpop.f32.mrb[0].mxu0
    %v701 = vadd.f32 0.0, %v700
    %v702 = vpop.f32.mrb[0].mxu0
    %703 = vmatprep.mubr.bf16.mxu0 %v442
    %704 = vmatmul.mubr.bf16.gmra.mrb[0].mxu0 %v441
    %v705 = vpop.f32.mrb[0].mxu0
    %v706 = vadd.f32 0.0, %v705
    %v707 = vpop.f32.mrb[0].mxu0
    %v708 = vpop.f32.mrb[0].mxu0
    %v709 = vadd.f32 0.0, %v708
    %v710 = vpop.f32.mrb[0].mxu0
    %711 = vmatprep.mubr.bf16.mxu0 %v444
    %712 = vmatmul.mubr.bf16.gmra.mrb[0].mxu0 %v443
    %v713 = vpop.f32.mrb[0].mxu0
    %v714 = vadd.f32 0.0, %v713
    %v715 = vpop.f32.mrb[0].mxu0
    %v716 = vpop.f32.mrb[0].mxu0
    %v717 = vadd.f32 0.0, %v716
    %v718 = vpop.f32.mrb[0].mxu0
    %719 = vmatprep.mubr.bf16.mxu0 %v446
    %720 = vmatmul.mubr.bf16.gmra.mrb[0].mxu0 %v445
    %v721 = vpop.f32.mrb[0].mxu0
    %v722 = vadd.f32 0.0, %v721
    %v723 = vpop.f32.mrb[0].mxu0
    %v724 = vpop.f32.mrb[0].mxu0
    %v725 = vadd.f32 0.0, %v724
    %v726 = vpop.f32.mrb[0].mxu0
    %727 = vmatprep.mubr.bf16.mxu0 %v448
    %728 = vmatmul.mubr.bf16.gmra.mrb[0].mxu0 %v447
    %v729 = vpop.f32.mrb[0].mxu0
    %v730 = vadd.f32 0.0, %v729
    %v731 = vpop.f32.mrb[0].mxu0
    %v732 = vpop.f32.mrb[0].mxu0
    %v733 = vadd.f32 0.0, %v732
    %v734 = vpop.f32.mrb[0].mxu0
    %735 = vmatprep.mubr.bf16.mxu0 %v450
    %736 = vmatmul.mubr.bf16.gmra.mrb[0].mxu0 %v449
    %v737 = vpop.f32.mrb[0].mxu0
    %v738 = vadd.f32 0.0, %v737
    %v739 = vpop.f32.mrb[0].mxu0
    %v740 = vpop.f32.mrb[0].mxu0
    %v741 = vadd.f32 0.0, %v740
    %v742 = vpop.f32.mrb[0].mxu0
    %743 = vmatprep.mubr.bf16.mxu0 %v452
    %744 = vmatmul.mubr.bf16.gmra.mrb[0].mxu0 %v451
    %v745 = vpop.f32.mrb[0].mxu0
    %v746 = vadd.f32 0.0, %v745
    %v747 = vpop.f32.mrb[0].mxu0
    %v748 = vpop.f32.mrb[0].mxu0
    %v749 = vadd.f32 0.0, %v748
    %v750 = vpop.f32.mrb[0].mxu0
    %751 = vmatprep.mubr.bf16.mxu0 %v454
    %752 = vmatmul.mubr.bf16.gmra.mrb[0].mxu0 %v453
    %v753 = vpop.f32.mrb[0].mxu0
    %v754 = vadd.f32 0.0, %v753
    %v755 = vpop.f32.mrb[0].mxu0
    %v756 = vpop.f32.mrb[0].mxu0
    %v757 = vadd.f32 0.0, %v756
    %v758 = vpop.f32.mrb[0].mxu0
    %759 = vmatprep.mubr.bf16.mxu0 %v456
    %760 = vmatmul.mubr.bf16.gmra.mrb[0].mxu0 %v455
    %v761 = vpop.f32.mrb[0].mxu0
    %v762 = vadd.f32 0.0, %v761
    %v763 = vpop.f32.mrb[0].mxu0
    %v764 = vpop.f32.mrb[0].mxu0
    %v765 = vadd.f32 0.0, %v764
    %v766 = vpop.f32.mrb[0].mxu0
    %767 = vmatprep.mubr.bf16.mxu0 %v458
    %768 = vmatmul.mubr.bf16.gmra.mrb[0].mxu0 %v457
    %v769 = vpop.f32.mrb[0].mxu0
    %v770 = vadd.f32 0.0, %v769
    %v771 = vpop.f32.mrb[0].mxu0
    %v772 = vpop.f32.mrb[0].mxu0
    %v773 = vadd.f32 0.0, %v772
    %v774 = vpop.f32.mrb[0].mxu0
    %775 = vmatprep.mubr.bf16.mxu0 %v460
    %776 = vmatmul.mubr.bf16.gmra.mrb[0].mxu0 %v459
    %v777 = vpop.f32.mrb[0].mxu0
    %v778 = vadd.f32 0.0, %v777
    %v779 = vpop.f32.mrb[0].mxu0
    %v780 = vpop.f32.mrb[0].mxu0
    %v781 = vadd.f32 0.0, %v780
    %v782 = vpop.f32.mrb[0].mxu0
    %783 = vmatprep.mubr.bf16.mxu0 %v462
    %784 = vmatmul.mubr.bf16.gmra.mrb[0].mxu0 %v461
    %v785 = vpop.f32.mrb[0].mxu0
    %v786 = vadd.f32 0.0, %v785
    %v787 = vpop.f32.mrb[0].mxu0
    %v788 = vpop.f32.mrb[0].mxu0
    %v789 = vadd.f32 0.0, %v788
    %v790 = vpop.f32.mrb[0].mxu0
    %791 = vmatprep.mubr.bf16.mxu0 %v464
    %792 = vmatmul.mubr.bf16.gmra.mrb[0].mxu0 %v463
    %v793 = vpop.f32.mrb[0].mxu0
    %v794 = vadd.f32 0.0, %v793
    %v795 = vpop.f32.mrb[0].mxu0
    %v796 = vpop.f32.mrb[0].mxu0
    %v797 = vadd.f32 0.0, %v796
    %v798 = vpop.f32.mrb[0].mxu0
    %799 = vmatprep.mubr.bf16.mxu0 %v466
    %800 = vmatmul.mubr.bf16.gmra.mrb[0].mxu0 %v465
    %v801 = vpop.f32.mrb[0].mxu0
    %v802 = vadd.f32 0.0, %v801
    %v803 = vpop.f32.mrb[0].mxu0
    %v804 = vpop.f32.mrb[0].mxu0
    %v805 = vadd.f32 0.0, %v804
    %v806 = vpop.f32.mrb[0].mxu0
    %807 = vmatprep.mubr.bf16.mxu0 %v468
    %808 = vmatmul.mubr.bf16.gmra.mrb[0].mxu0 %v467
    %v809 = vpop.f32.mrb[0].mxu0
    %v810 = vadd.f32 0.0, %v809
    %v811 = vpop.f32.mrb[0].mxu0
    %v812 = vpop.f32.mrb[0].mxu0
    %v813 = vadd.f32 0.0, %v812
    %v814 = vpop.f32.mrb[0].mxu0
    %815 = vmatprep.mubr.bf16.mxu0 %v470
    %816 = vmatmul.mubr.bf16.gmra.mrb[0].mxu0 %v469
    %v817 = vpop.f32.mrb[0].mxu0
    %v818 = vadd.f32 0.0, %v817
    %v819 = vpop.f32.mrb[0].mxu0
    %v820 = vpop.f32.mrb[0].mxu0
    %v821 = vadd.f32 0.0, %v820
    %v822 = vpop.f32.mrb[0].mxu0
    %823 = vmatprep.mubr.bf16.mxu0 %v472
    %824 = vmatmul.mubr.bf16.gmra.mrb[0].mxu0 %v471
    %v825 = vpop.f32.mrb[0].mxu0
    %v826 = vadd.f32 0.0, %v825
    %v827 = vpop.f32.mrb[0].mxu0
    %v828 = vpop.f32.mrb[0].mxu0
    %v829 = vadd.f32 0.0, %v828
    %v830 = vpop.f32.mrb[0].mxu0
    %831 = vmatprep.mubr.bf16.mxu0 %v474
    %832 = vmatmul.mubr.bf16.gmra.mrb[0].mxu0 %v473
    %v833 = vpop.f32.mrb[0].mxu0
    %v834 = vadd.f32 0.0, %v833
    %v835 = vpop.f32.mrb[0].mxu0
    %v836 = vpop.f32.mrb[0].mxu0
    %v837 = vadd.f32 0.0, %v836
    %v838 = vpop.f32.mrb[0].mxu0
    %839 = vmatprep.mubr.bf16.mxu0 %v476
    %840 = vmatmul.mubr.bf16.gmra.mrb[0].mxu0 %v475
    %v841 = vpop.f32.mrb[0].mxu0
    %v842 = vadd.f32 0.0, %v841
    %v843 = vpop.f32.mrb[0].mxu0
    %v844 = vpop.f32.mrb[0].mxu0
    %v845 = vadd.f32 0.0, %v844
    %v846 = vpop.f32.mrb[0].mxu0
    %847 = vmatprep.mubr.bf16.mxu0 %v478
    %848 = vmatmul.mubr.bf16.gmra.mrb[0].mxu0 %v477
    %v849 = vpop.f32.mrb[0].mxu0
    %v850 = vadd.f32 0.0, %v849
    %v851 = vpop.f32.mrb[0].mxu0
    %v852 = vpop.f32.mrb[0].mxu0
    %v853 = vadd.f32 0.0, %v852
    %v854 = vpop.f32.mrb[0].mxu0
    %855 = vmatprep.mubr.bf16.mxu0 %v480
    %856 = vmatmul.mubr.bf16.gmra.mrb[0].mxu0 %v479
    %v857 = vpop.f32.mrb[0].mxu0
    %v858 = vadd.f32 0.0, %v857
    %v859 = vpop.f32.mrb[0].mxu0
    %v860 = vpop.f32.mrb[0].mxu0
    %v861 = vadd.f32 0.0, %v860
    %v862 = vpop.f32.mrb[0].mxu0
    %863 = vmatprep.mubr.bf16.mxu0 %v482
    %864 = vmatmul.mubr.bf16.gmra.mrb[0].mxu0 %v481
    %v865 = vpop.f32.mrb[0].mxu0
    %v866 = vadd.f32 0.0, %v865
    %v867 = vpop.f32.mrb[0].mxu0
    %v868 = vpop.f32.mrb[0].mxu0
    %v869 = vadd.f32 0.0, %v868
    %v870 = vpop.f32.mrb[0].mxu0
    %871 = vmatprep.mubr.bf16.mxu0 %v484
    %872 = vmatmul.mubr.bf16.gmra.mrb[0].mxu0 %v483
    %v873 = vpop.f32.mrb[0].mxu0
    %v874 = vadd.f32 0.0, %v873
    %v875 = vpop.f32.mrb[0].mxu0
    %v876 = vpop.f32.mrb[0].mxu0
    %v877 = vadd.f32 0.0, %v876
    %v878 = vpop.f32.mrb[0].mxu0
    %879 = vmatprep.mubr.bf16.mxu0 %v486
    %880 = vmatmul.mubr.bf16.gmra.mrb[0].mxu0 %v485
    %v881 = vpop.f32.mrb[0].mxu0
    %v882 = vadd.f32 0.0, %v881
    %v883 = vpop.f32.mrb[0].mxu0
    %v884 = vpop.f32.mrb[0].mxu0
    %v885 = vadd.f32 0.0, %v884
    %v886 = vpop.f32.mrb[0].mxu0
    %887 = vmatprep.mubr.bf16.mxu0 %v488
    %888 = vmatmul.mubr.bf16.gmra.mrb[0].mxu0 %v487
    %v889 = vpop.f32.mrb[0].mxu0
    %v890 = vadd.f32 0.0, %v889
    %v891 = vpop.f32.mrb[0].mxu0
    %v892 = vpop.f32.mrb[0].mxu0
    %v893 = vadd.f32 0.0, %v892
    %v894 = vpop.f32.mrb[0].mxu0
    %895 = vmatprep.mubr.bf16.mxu0 %v490
    %896 = vmatmul.mubr.bf16.gmra.mrb[0].mxu0 %v489
    %v897 = vpop.f32.mrb[0].mxu0
    %v898 = vadd.f32 0.0, %v897
    %v899 = vpop.f32.mrb[0].mxu0
    %v900 = vpop.f32.mrb[0].mxu0
    %v901 = vadd.f32 0.0, %v900
    %v902 = vpop.f32.mrb[0].mxu0
    %903 = vmatprep.mubr.bf16.mxu0 %v492
    %904 = vmatmul.mubr.bf16.gmra.mrb[0].mxu0 %v491
    %v905 = vpop.f32.mrb[0].mxu0
    %v906 = vadd.f32 0.0, %v905
    %v907 = vpop.f32.mrb[0].mxu0
    %v908 = vpop.f32.mrb[0].mxu0
    %v909 = vadd.f32 0.0, %v908
    %v910 = vpop.f32.mrb[0].mxu0
    %911 = vmatprep.mubr.bf16.mxu0 %v494
    %912 = vmatmul.mubr.bf16.gmra.mrb[0].mxu0 %v493
    %v913 = vpop.f32.mrb[0].mxu0
    %v914 = vadd.f32 0.0, %v913
    %v915 = vpop.f32.mrb[0].mxu0
    %v916 = vpop.f32.mrb[0].mxu0
    %v917 = vadd.f32 0.0, %v916
    %v918 = vpop.f32.mrb[0].mxu0
    %919 = vmatprep.mubr.bf16.mxu0 %v496
    %920 = vmatmul.mubr.bf16.gmra.mrb[0].mxu0 %v495
    %v921 = vpop.f32.mrb[0].mxu0
    %v922 = vadd.f32 0.0, %v921
    %v923 = vpop.f32.mrb[0].mxu0
    %v924 = vpop.f32.mrb[0].mxu0
    %v925 = vadd.f32 0.0, %v924
    %v926 = vpop.f32.mrb[0].mxu0
    %927 = vmatprep.mubr.bf16.mxu0 %v498
    %928 = vmatmul.mubr.bf16.gmra.mrb[0].mxu0 %v497
    %v929 = vpop.f32.mrb[0].mxu0
    %v930 = vadd.f32 0.0, %v929
    %v931 = vpop.f32.mrb[0].mxu0
    %v932 = vpop.f32.mrb[0].mxu0
    %v933 = vadd.f32 0.0, %v932
    %v934 = vpop.f32.mrb[0].mxu0
    %935 = vmatprep.mubr.bf16.mxu0 %v500
    %936 = vmatmul.mubr.bf16.gmra.mrb[0].mxu0 %v499
    %v937 = vpop.f32.mrb[0].mxu0
    %v938 = vadd.f32 0.0, %v937
    %v939 = vpop.f32.mrb[0].mxu0
    %v940 = vpop.f32.mrb[0].mxu0
    %v941 = vadd.f32 0.0, %v940
    %v942 = vpop.f32.mrb[0].mxu0
    %943 = vmatprep.mubr.bf16.mxu0 %v502
    %944 = vmatmul.mubr.bf16.gmra.mrb[0].mxu0 %v501
    %v945 = vpop.f32.mrb[0].mxu0
    %v946 = vadd.f32 0.0, %v945
    %v947 = vpop.f32.mrb[0].mxu0
    %v948 = vpop.f32.mrb[0].mxu0
    %v949 = vadd.f32 0.0, %v948
    %v950 = vpop.f32.mrb[0].mxu0
    %951 = vdwg.mxu0
    %v952 = vadd.f32 %v87, %v698
    %v953 = vadd.f32 %v88, %v701
    %v954 = vadd.f32 %v89, %v706
    %v955 = vadd.f32 %v90, %v709
    %v956 = vadd.f32 %v91, %v714
    %v957 = vadd.f32 %v92, %v717
    %v958 = vadd.f32 %v93, %v722
    %v959 = vadd.f32 %v94, %v725
    %v960 = vadd.f32 %v95, %v730
    %v961 = vadd.f32 %v96, %v733
    %v962 = vadd.f32 %v97, %v738
    %v963 = vadd.f32 %v98, %v741
    %v964 = vadd.f32 %v99, %v746
    %v965 = vadd.f32 %v100, %v749
    %v966 = vadd.f32 %v101, %v754
    %v967 = vadd.f32 %v102, %v757
    %v968 = vadd.f32 %v103, %v762
    %v969 = vadd.f32 %v104, %v765
    %v970 = vadd.f32 %v105, %v770
    %v971 = vadd.f32 %v106, %v773
    %v972 = vadd.f32 %v107, %v778
    %v973 = vadd.f32 %v108, %v781
    %v974 = vadd.f32 %v109, %v786
    %v975 = vadd.f32 %v110, %v789
    %v976 = vadd.f32 %v111, %v794
    %v977 = vadd.f32 %v112, %v797
    %v978 = vadd.f32 %v113, %v802
    %v979 = vadd.f32 %v114, %v805
    %v980 = vadd.f32 %v115, %v810
    %v981 = vadd.f32 %v116, %v813
    %v982 = vadd.f32 %v117, %v818
    %v983 = vadd.f32 %v118, %v821
    %v984 = vadd.f32 %v119, %v826
    %v985 = vadd.f32 %v120, %v829
    %v986 = vadd.f32 %v121, %v834
    %v987 = vadd.f32 %v122, %v837
    %v988 = vadd.f32 %v123, %v842
    %v989 = vadd.f32 %v124, %v845
    %v990 = vadd.f32 %v125, %v850
    %v991 = vadd.f32 %v126, %v853
    %v992 = vadd.f32 %v127, %v858
    %v993 = vadd.f32 %v128, %v861
    %v994 = vadd.f32 %v129, %v866
    %v995 = vadd.f32 %v130, %v869
    %v996 = vadd.f32 %v131, %v874
    %v997 = vadd.f32 %v132, %v877
    %v998 = vadd.f32 %v133, %v882
    %v999 = vadd.f32 %v134, %v885
    %v1000 = vadd.f32 %v135, %v890
    %v1001 = vadd.f32 %v136, %v893
    %v1002 = vadd.f32 %v137, %v898
    %v1003 = vadd.f32 %v138, %v901
    %v1004 = vadd.f32 %v139, %v906
    %v1005 = vadd.f32 %v140, %v909
    %v1006 = vadd.f32 %v141, %v914
    %v1007 = vadd.f32 %v142, %v917
    %v1008 = vadd.f32 %v143, %v922
    %v1009 = vadd.f32 %v144, %v925
    %v1010 = vadd.f32 %v145, %v930
    %v1011 = vadd.f32 %v146, %v933
    %v1012 = vadd.f32 %v147, %v938
    %v1013 = vadd.f32 %v148, %v941
    %v1014 = vadd.f32 %v149, %v946
    %v1015 = vadd.f32 %v150, %v949
    %1016 = vst [vmem:[#allocation2] sm:$0xff] %v952
    %1017 = vst [vmem:[#allocation2 + $0x8] sm:$0xff] %v953
    %1018 = vst [vmem:[#allocation2 + $0x10] sm:$0xff] %v954
    %1019 = vst [vmem:[#allocation2 + $0x18] sm:$0xff] %v955
    %1020 = vst [vmem:[#allocation2 + $0x20] sm:$0xff] %v956
    %1021 = vst [vmem:[#allocation2 + $0x28] sm:$0xff] %v957
    %1022 = vst [vmem:[#allocation2 + $0x30] sm:$0xff] %v958
    %1023 = vst [vmem:[#allocation2 + $0x38] sm:$0xff] %v959
    %1024 = vst [vmem:[#allocation2 + $0x40] sm:$0xff] %v960
    %1025 = vst [vmem:[#allocation2 + $0x48] sm:$0xff] %v961
    %1026 = vst [vmem:[#allocation2 + $0x50] sm:$0xff] %v962
    %1027 = vst [vmem:[#allocation2 + $0x58] sm:$0xff] %v963
    %1028 = vst [vmem:[#allocation2 + $0x60] sm:$0xff] %v964
    %1029 = vst [vmem:[#allocation2 + $0x68] sm:$0xff] %v965
    %1030 = vst [vmem:[#allocation2 + $0x70] sm:$0xff] %v966
    %1031 = vst [vmem:[#allocation2 + $0x78] sm:$0xff] %v967
    %1032 = vst [vmem:[#allocation2 + $0x80] sm:$0xff] %v968
    %1033 = vst [vmem:[#allocation2 + $0x88] sm:$0xff] %v969
    %1034 = vst [vmem:[#allocation2 + $0x90] sm:$0xff] %v970
    %1035 = vst [vmem:[#allocation2 + $0x98] sm:$0xff] %v971
    %1036 = vst [vmem:[#allocation2 + $0xa0] sm:$0xff] %v972
    %1037 = vst [vmem:[#allocation2 + $0xa8] sm:$0xff] %v973
    %1038 = vst [vmem:[#allocation2 + $0xb0] sm:$0xff] %v974
    %1039 = vst [vmem:[#allocation2 + $0xb8] sm:$0xff] %v975
    %1040 = vst [vmem:[#allocation2 + $0xc0] sm:$0xff] %v976
    %1041 = vst [vmem:[#allocation2 + $0xc8] sm:$0xff] %v977
    %1042 = vst [vmem:[#allocation2 + $0xd0] sm:$0xff] %v978
    %1043 = vst [vmem:[#allocation2 + $0xd8] sm:$0xff] %v979
    %1044 = vst [vmem:[#allocation2 + $0xe0] sm:$0xff] %v980
    %1045 = vst [vmem:[#allocation2 + $0xe8] sm:$0xff] %v981
    %1046 = vst [vmem:[#allocation2 + $0xf0] sm:$0xff] %v982
    %1047 = vst [vmem:[#allocation2 + $0xf8] sm:$0xff] %v983
    %1048 = vst [vmem:[#allocation2 + $0x100] sm:$0xff] %v984
    %1049 = vst [vmem:[#allocation2 + $0x108] sm:$0xff] %v985
    %1050 = vst [vmem:[#allocation2 + $0x110] sm:$0xff] %v986
    %1051 = vst [vmem:[#allocation2 + $0x118] sm:$0xff] %v987
    %1052 = vst [vmem:[#allocation2 + $0x120] sm:$0xff] %v988
    %1053 = vst [vmem:[#allocation2 + $0x128] sm:$0xff] %v989
    %1054 = vst [vmem:[#allocation2 + $0x130] sm:$0xff] %v990
    %1055 = vst [vmem:[#allocation2 + $0x138] sm:$0xff] %v991
    %1056 = vst [vmem:[#allocation2 + $0x140] sm:$0xff] %v992
    %1057 = vst [vmem:[#allocation2 + $0x148] sm:$0xff] %v993
    %1058 = vst [vmem:[#allocation2 + $0x150] sm:$0xff] %v994
    %1059 = vst [vmem:[#allocation2 + $0x158] sm:$0xff] %v995
    %1060 = vst [vmem:[#allocation2 + $0x160] sm:$0xff] %v996
    %1061 = vst [vmem:[#allocation2 + $0x168] sm:$0xff] %v997
    %1062 = vst [vmem:[#allocation2 + $0x170] sm:$0xff] %v998
    %1063 = vst [vmem:[#allocation2 + $0x178] sm:$0xff] %v999
    %1064 = vst [vmem:[#allocation2 + $0x180] sm:$0xff] %v1000
    %1065 = vst [vmem:[#allocation2 + $0x188] sm:$0xff] %v1001
    %1066 = vst [vmem:[#allocation2 + $0x190] sm:$0xff] %v1002
    %1067 = vst [vmem:[#allocation2 + $0x198] sm:$0xff] %v1003
    %1068 = vst [vmem:[#allocation2 + $0x1a0] sm:$0xff] %v1004
    %1069 = vst [vmem:[#allocation2 + $0x1a8] sm:$0xff] %v1005
    %1070 = vst [vmem:[#allocation2 + $0x1b0] sm:$0xff] %v1006
    %1071 = vst [vmem:[#allocation2 + $0x1b8] sm:$0xff] %v1007
    %1072 = vst [vmem:[#allocation2 + $0x1c0] sm:$0xff] %v1008
    %1073 = vst [vmem:[#allocation2 + $0x1c8] sm:$0xff] %v1009
    %1074 = vst [vmem:[#allocation2 + $0x1d0] sm:$0xff] %v1010
    %1075 = vst [vmem:[#allocation2 + $0x1d8] sm:$0xff] %v1011
    %1076 = vst [vmem:[#allocation2 + $0x1e0] sm:$0xff] %v1012
    %1077 = vst [vmem:[#allocation2 + $0x1e8] sm:$0xff] %v1013
    %1078 = vst [vmem:[#allocation2 + $0x1f0] sm:$0xff] %v1014
    %1079 = vst [vmem:[#allocation2 + $0x1f8] sm:$0xff] %v1015
    // Predicated region
    $region22: #{conv_im2col_bn.1} parent=1 // pred_check
      %p1080 = pneg %p19
    $region23: #{conv_im2col_bn.1} parent=1 // pred_check_branch
      %1082 = sbr.rel (%p1080) target = $region25
    $region24: #{conv_im2col_bn.1} parent=1 // pred_region
      %v1083 = vld [vmem:[#allocation2] sm:$0xff]
      %v1084 = vld [vmem:[#allocation2 + $0x8] sm:$0xff]
      %v1085 = vld [vmem:[#allocation2 + $0x10] sm:$0xff]
      %v1086 = vld [vmem:[#allocation2 + $0x18] sm:$0xff]
      %v1087 = vld [vmem:[#allocation2 + $0x20] sm:$0xff]
      %v1088 = vld [vmem:[#allocation2 + $0x28] sm:$0xff]
      %v1089 = vld [vmem:[#allocation2 + $0x30] sm:$0xff]
      %v1090 = vld [vmem:[#allocation2 + $0x38] sm:$0xff]
      %v1091 = vld [vmem:[#allocation2 + $0x40] sm:$0xff]
      %v1092 = vld [vmem:[#allocation2 + $0x48] sm:$0xff]
      %v1093 = vld [vmem:[#allocation2 + $0x50] sm:$0xff]
      %v1094 = vld [vmem:[#allocation2 + $0x58] sm:$0xff]
      %v1095 = vld [vmem:[#allocation2 + $0x60] sm:$0xff]
      %v1096 = vld [vmem:[#allocation2 + $0x68] sm:$0xff]
      %v1097 = vld [vmem:[#allocation2 + $0x70] sm:$0xff]
      %v1098 = vld [vmem:[#allocation2 + $0x78] sm:$0xff]
      %v1099 = vld [vmem:[#allocation2 + $0x80] sm:$0xff]
      %v1100 = vld [vmem:[#allocation2 + $0x88] sm:$0xff]
      %v1101 = vld [vmem:[#allocation2 + $0x90] sm:$0xff]
      %v1102 = vld [vmem:[#allocation2 + $0x98] sm:$0xff]
      %v1103 = vld [vmem:[#allocation2 + $0xa0] sm:$0xff]
      %v1104 = vld [vmem:[#allocation2 + $0xa8] sm:$0xff]
      %v1105 = vld [vmem:[#allocation2 + $0xb0] sm:$0xff]
      %v1106 = vld [vmem:[#allocation2 + $0xb8] sm:$0xff]
      %v1107 = vld [vmem:[#allocation2 + $0xc0] sm:$0xff]
      %v1108 = vld [vmem:[#allocation2 + $0xc8] sm:$0xff]
      %v1109 = vld [vmem:[#allocation2 + $0xd0] sm:$0xff]
      %v1110 = vld [vmem:[#allocation2 + $0xd8] sm:$0xff]
      %v1111 = vld [vmem:[#allocation2 + $0xe0] sm:$0xff]
      %v1112 = vld [vmem:[#allocation2 + $0xe8] sm:$0xff]
      %v1113 = vld [vmem:[#allocation2 + $0xf0] sm:$0xff]
      %v1114 = vld [vmem:[#allocation2 + $0xf8] sm:$0xff]
      %v1115 = vld [vmem:[#allocation2 + $0x100] sm:$0xff]
      %v1116 = vld [vmem:[#allocation2 + $0x108] sm:$0xff]
      %v1117 = vld [vmem:[#allocation2 + $0x110] sm:$0xff]
      %v1118 = vld [vmem:[#allocation2 + $0x118] sm:$0xff]
      %v1119 = vld [vmem:[#allocation2 + $0x120] sm:$0xff]
      %v1120 = vld [vmem:[#allocation2 + $0x128] sm:$0xff]
      %v1121 = vld [vmem:[#allocation2 + $0x130] sm:$0xff]
      %v1122 = vld [vmem:[#allocation2 + $0x138] sm:$0xff]
      %v1123 = vld [vmem:[#allocation2 + $0x140] sm:$0xff]
      %v1124 = vld [vmem:[#allocation2 + $0x148] sm:$0xff]
      %v1125 = vld [vmem:[#allocation2 + $0x150] sm:$0xff]
      %v1126 = vld [vmem:[#allocation2 + $0x158] sm:$0xff]
      %v1127 = vld [vmem:[#allocation2 + $0x160] sm:$0xff]
      %v1128 = vld [vmem:[#allocation2 + $0x168] sm:$0xff]
      %v1129 = vld [vmem:[#allocation2 + $0x170] sm:$0xff]
      %v1130 = vld [vmem:[#allocation2 + $0x178] sm:$0xff]
      %v1131 = vld [vmem:[#allocation2 + $0x180] sm:$0xff]
      %v1132 = vld [vmem:[#allocation2 + $0x188] sm:$0xff]
      %v1133 = vld [vmem:[#allocation2 + $0x190] sm:$0xff]
      %v1134 = vld [vmem:[#allocation2 + $0x198] sm:$0xff]
      %v1135 = vld [vmem:[#allocation2 + $0x1a0] sm:$0xff]
      %v1136 = vld [vmem:[#allocation2 + $0x1a8] sm:$0xff]
      %v1137 = vld [vmem:[#allocation2 + $0x1b0] sm:$0xff]
      %v1138 = vld [vmem:[#allocation2 + $0x1b8] sm:$0xff]
      %v1139 = vld [vmem:[#allocation2 + $0x1c0] sm:$0xff]
      %v1140 = vld [vmem:[#allocation2 + $0x1c8] sm:$0xff]
      %v1141 = vld [vmem:[#allocation2 + $0x1d0] sm:$0xff]
      %v1142 = vld [vmem:[#allocation2 + $0x1d8] sm:$0xff]
      %v1143 = vld [vmem:[#allocation2 + $0x1e0] sm:$0xff]
      %v1144 = vld [vmem:[#allocation2 + $0x1e8] sm:$0xff]
      %v1145 = vld [vmem:[#allocation2 + $0x1f0] sm:$0xff]
      %v1146 = vld [vmem:[#allocation2 + $0x1f8] sm:$0xff]
      %v1147 = vld [vmem:[%s2] sm:$0x1]
      %v1149 = vlaneseq
      %v1150 = vshrl.u32 %v1149, 7
      %v1151 = vsub.s32 0, %v1150
      %v1152 = vrot.slane %v1147, %v1151
      %v1154 = vmul.f32 %v1083, %v1152
      %v1155 = vmul.f32 %v1084, %v1152
      %v1156 = vmul.f32 %v1085, %v1152
      %v1157 = vmul.f32 %v1086, %v1152
      %v1158 = vmul.f32 %v1087, %v1152
      %v1159 = vmul.f32 %v1088, %v1152
      %v1160 = vmul.f32 %v1089, %v1152
      %v1161 = vmul.f32 %v1090, %v1152
      %v1162 = vmul.f32 %v1091, %v1152
      %v1163 = vmul.f32 %v1092, %v1152
      %v1164 = vmul.f32 %v1093, %v1152
      %v1165 = vmul.f32 %v1094, %v1152
      %v1166 = vmul.f32 %v1095, %v1152
      %v1167 = vmul.f32 %v1096, %v1152
      %v1168 = vmul.f32 %v1097, %v1152
      %v1169 = vmul.f32 %v1098, %v1152
      %v1170 = vmul.f32 %v1099, %v1152
      %v1171 = vmul.f32 %v1100, %v1152
      %v1172 = vmul.f32 %v1101, %v1152
      %v1173 = vmul.f32 %v1102, %v1152
      %v1174 = vmul.f32 %v1103, %v1152
      %v1175 = vmul.f32 %v1104, %v1152
      %v1176 = vmul.f32 %v1105, %v1152
      %v1177 = vmul.f32 %v1106, %v1152
      %v1178 = vmul.f32 %v1107, %v1152
      %v1179 = vmul.f32 %v1108, %v1152
      %v1180 = vmul.f32 %v1109, %v1152
      %v1181 = vmul.f32 %v1110, %v1152
      %v1182 = vmul.f32 %v1111, %v1152
      %v1183 = vmul.f32 %v1112, %v1152
      %v1184 = vmul.f32 %v1113, %v1152
      %v1185 = vmul.f32 %v1114, %v1152
      %v1186 = vmul.f32 %v1115, %v1152
      %v1187 = vmul.f32 %v1116, %v1152
      %v1188 = vmul.f32 %v1117, %v1152
      %v1189 = vmul.f32 %v1118, %v1152
      %v1190 = vmul.f32 %v1119, %v1152
      %v1191 = vmul.f32 %v1120, %v1152
      %v1192 = vmul.f32 %v1121, %v1152
      %v1193 = vmul.f32 %v1122, %v1152
      %v1194 = vmul.f32 %v1123, %v1152
      %v1195 = vmul.f32 %v1124, %v1152
      %v1196 = vmul.f32 %v1125, %v1152
      %v1197 = vmul.f32 %v1126, %v1152
      %v1198 = vmul.f32 %v1127, %v1152
      %v1199 = vmul.f32 %v1128, %v1152
      %v1200 = vmul.f32 %v1129, %v1152
      %v1201 = vmul.f32 %v1130, %v1152
      %v1202 = vmul.f32 %v1131, %v1152
      %v1203 = vmul.f32 %v1132, %v1152
      %v1204 = vmul.f32 %v1133, %v1152
      %v1205 = vmul.f32 %v1134, %v1152
      %v1206 = vmul.f32 %v1135, %v1152
      %v1207 = vmul.f32 %v1136, %v1152
      %v1208 = vmul.f32 %v1137, %v1152
      %v1209 = vmul.f32 %v1138, %v1152
      %v1210 = vmul.f32 %v1139, %v1152
      %v1211 = vmul.f32 %v1140, %v1152
      %v1212 = vmul.f32 %v1141, %v1152
      %v1213 = vmul.f32 %v1142, %v1152
      %v1214 = vmul.f32 %v1143, %v1152
      %v1215 = vmul.f32 %v1144, %v1152
      %v1216 = vmul.f32 %v1145, %v1152
      %v1217 = vmul.f32 %v1146, %v1152
      %v1218 = vld [vmem:[%s3] sm:$0x1]
      %v1220 = vlaneseq
      %v1221 = vshrl.u32 %v1220, 7
      %v1222 = vsub.s32 0, %v1221
      %v1223 = vrot.slane %v1218, %v1222
      %v1225 = vadd.f32 %v1154, %v1223
      %v1226 = vadd.f32 %v1155, %v1223
      %v1227 = vadd.f32 %v1156, %v1223
      %v1228 = vadd.f32 %v1157, %v1223
      %v1229 = vadd.f32 %v1158, %v1223
      %v1230 = vadd.f32 %v1159, %v1223
      %v1231 = vadd.f32 %v1160, %v1223
      %v1232 = vadd.f32 %v1161, %v1223
      %v1233 = vadd.f32 %v1162, %v1223
      %v1234 = vadd.f32 %v1163, %v1223
      %v1235 = vadd.f32 %v1164, %v1223
      %v1236 = vadd.f32 %v1165, %v1223
      %v1237 = vadd.f32 %v1166, %v1223
      %v1238 = vadd.f32 %v1167, %v1223
      %v1239 = vadd.f32 %v1168, %v1223
      %v1240 = vadd.f32 %v1169, %v1223
      %v1241 = vadd.f32 %v1170, %v1223
      %v1242 = vadd.f32 %v1171, %v1223
      %v1243 = vadd.f32 %v1172, %v1223
      %v1244 = vadd.f32 %v1173, %v1223
      %v1245 = vadd.f32 %v1174, %v1223
      %v1246 = vadd.f32 %v1175, %v1223
      %v1247 = vadd.f32 %v1176, %v1223
      %v1248 = vadd.f32 %v1177, %v1223
      %v1249 = vadd.f32 %v1178, %v1223
      %v1250 = vadd.f32 %v1179, %v1223
      %v1251 = vadd.f32 %v1180, %v1223
      %v1252 = vadd.f32 %v1181, %v1223
      %v1253 = vadd.f32 %v1182, %v1223
      %v1254 = vadd.f32 %v1183, %v1223
      %v1255 = vadd.f32 %v1184, %v1223
      %v1256 = vadd.f32 %v1185, %v1223
      %v1257 = vadd.f32 %v1186, %v1223
      %v1258 = vadd.f32 %v1187, %v1223
      %v1259 = vadd.f32 %v1188, %v1223
      %v1260 = vadd.f32 %v1189, %v1223
      %v1261 = vadd.f32 %v1190, %v1223
      %v1262 = vadd.f32 %v1191, %v1223
      %v1263 = vadd.f32 %v1192, %v1223
      %v1264 = vadd.f32 %v1193, %v1223
      %v1265 = vadd.f32 %v1194, %v1223
      %v1266 = vadd.f32 %v1195, %v1223
      %v1267 = vadd.f32 %v1196, %v1223
      %v1268 = vadd.f32 %v1197, %v1223
      %v1269 = vadd.f32 %v1198, %v1223
      %v1270 = vadd.f32 %v1199, %v1223
      %v1271 = vadd.f32 %v1200, %v1223
      %v1272 = vadd.f32 %v1201, %v1223
      %v1273 = vadd.f32 %v1202, %v1223
      %v1274 = vadd.f32 %v1203, %v1223
      %v1275 = vadd.f32 %v1204, %v1223
      %v1276 = vadd.f32 %v1205, %v1223
      %v1277 = vadd.f32 %v1206, %v1223
      %v1278 = vadd.f32 %v1207, %v1223
      %v1279 = vadd.f32 %v1208, %v1223
      %v1280 = vadd.f32 %v1209, %v1223
      %v1281 = vadd.f32 %v1210, %v1223
      %v1282 = vadd.f32 %v1211, %v1223
      %v1283 = vadd.f32 %v1212, %v1223
      %v1284 = vadd.f32 %v1213, %v1223
      %v1285 = vadd.f32 %v1214, %v1223
      %v1286 = vadd.f32 %v1215, %v1223
      %v1287 = vadd.f32 %v1216, %v1223
      %v1288 = vadd.f32 %v1217, %v1223
      %v1289 = vmax.f32 %v1225, 0.0
      %v1290 = vmax.f32 %v1226, 0.0
      %v1291 = vmax.f32 %v1227, 0.0
      %v1292 = vmax.f32 %v1228, 0.0
      %v1293 = vmax.f32 %v1229, 0.0
      %v1294 = vmax.f32 %v1230, 0.0
      %v1295 = vmax.f32 %v1231, 0.0
      %v1296 = vmax.f32 %v1232, 0.0
      %v1297 = vmax.f32 %v1233, 0.0
      %v1298 = vmax.f32 %v1234, 0.0
      %v1299 = vmax.f32 %v1235, 0.0
      %v1300 = vmax.f32 %v1236, 0.0
      %v1301 = vmax.f32 %v1237, 0.0
      %v1302 = vmax.f32 %v1238, 0.0
      %v1303 = vmax.f32 %v1239, 0.0
      %v1304 = vmax.f32 %v1240, 0.0
      %v1305 = vmax.f32 %v1241, 0.0
      %v1306 = vmax.f32 %v1242, 0.0
      %v1307 = vmax.f32 %v1243, 0.0
      %v1308 = vmax.f32 %v1244, 0.0
      %v1309 = vmax.f32 %v1245, 0.0
      %v1310 = vmax.f32 %v1246, 0.0
      %v1311 = vmax.f32 %v1247, 0.0
      %v1312 = vmax.f32 %v1248, 0.0
      %v1313 = vmax.f32 %v1249, 0.0
      %v1314 = vmax.f32 %v1250, 0.0
      %v1315 = vmax.f32 %v1251, 0.0
      %v1316 = vmax.f32 %v1252, 0.0
      %v1317 = vmax.f32 %v1253, 0.0
      %v1318 = vmax.f32 %v1254, 0.0
      %v1319 = vmax.f32 %v1255, 0.0
      %v1320 = vmax.f32 %v1256, 0.0
      %v1321 = vmax.f32 %v1257, 0.0
      %v1322 = vmax.f32 %v1258, 0.0
      %v1323 = vmax.f32 %v1259, 0.0
      %v1324 = vmax.f32 %v1260, 0.0
      %v1325 = vmax.f32 %v1261, 0.0
      %v1326 = vmax.f32 %v1262, 0.0
      %v1327 = vmax.f32 %v1263, 0.0
      %v1328 = vmax.f32 %v1264, 0.0
      %v1329 = vmax.f32 %v1265, 0.0
      %v1330 = vmax.f32 %v1266, 0.0
      %v1331 = vmax.f32 %v1267, 0.0
      %v1332 = vmax.f32 %v1268, 0.0
      %v1333 = vmax.f32 %v1269, 0.0
      %v1334 = vmax.f32 %v1270, 0.0
      %v1335 = vmax.f32 %v1271, 0.0
      %v1336 = vmax.f32 %v1272, 0.0
      %v1337 = vmax.f32 %v1273, 0.0
      %v1338 = vmax.f32 %v1274, 0.0
      %v1339 = vmax.f32 %v1275, 0.0
      %v1340 = vmax.f32 %v1276, 0.0
      %v1341 = vmax.f32 %v1277, 0.0
      %v1342 = vmax.f32 %v1278, 0.0
      %v1343 = vmax.f32 %v1279, 0.0
      %v1344 = vmax.f32 %v1280, 0.0
      %v1345 = vmax.f32 %v1281, 0.0
      %v1346 = vmax.f32 %v1282, 0.0
      %v1347 = vmax.f32 %v1283, 0.0
      %v1348 = vmax.f32 %v1284, 0.0
      %v1349 = vmax.f32 %v1285, 0.0
      %v1350 = vmax.f32 %v1286, 0.0
      %v1351 = vmax.f32 %v1287, 0.0
      %v1352 = vmax.f32 %v1288, 0.0
      %v1353 = vpack.c.bf16 %v1290, %v1289
      %v1354 = vpack.c.bf16 %v1292, %v1291
      %v1355 = vpack.c.bf16 %v1294, %v1293
      %v1356 = vpack.c.bf16 %v1296, %v1295
      %v1357 = vpack.c.bf16 %v1298, %v1297
      %v1358 = vpack.c.bf16 %v1300, %v1299
      %v1359 = vpack.c.bf16 %v1302, %v1301
      %v1360 = vpack.c.bf16 %v1304, %v1303
      %v1361 = vpack.c.bf16 %v1306, %v1305
      %v1362 = vpack.c.bf16 %v1308, %v1307
      %v1363 = vpack.c.bf16 %v1310, %v1309
      %v1364 = vpack.c.bf16 %v1312, %v1311
      %v1365 = vpack.c.bf16 %v1314, %v1313
      %v1366 = vpack.c.bf16 %v1316, %v1315
      %v1367 = vpack.c.bf16 %v1318, %v1317
      %v1368 = vpack.c.bf16 %v1320, %v1319
      %v1369 = vpack.c.bf16 %v1322, %v1321
      %v1370 = vpack.c.bf16 %v1324, %v1323
      %v1371 = vpack.c.bf16 %v1326, %v1325
      %v1372 = vpack.c.bf16 %v1328, %v1327
      %v1373 = vpack.c.bf16 %v1330, %v1329
      %v1374 = vpack.c.bf16 %v1332, %v1331
      %v1375 = vpack.c.bf16 %v1334, %v1333
      %v1376 = vpack.c.bf16 %v1336, %v1335
      %v1377 = vpack.c.bf16 %v1338, %v1337
      %v1378 = vpack.c.bf16 %v1340, %v1339
      %v1379 = vpack.c.bf16 %v1342, %v1341
      %v1380 = vpack.c.bf16 %v1344, %v1343
      %v1381 = vpack.c.bf16 %v1346, %v1345
      %v1382 = vpack.c.bf16 %v1348, %v1347
      %v1383 = vpack.c.bf16 %v1350, %v1349
      %v1384 = vpack.c.bf16 %v1352, %v1351
      %v1417 = vunpack.c.l.b16 %v1353
      %v1418 = vunpack.c.h.b16 %v1353
      %v1419 = vunpack.c.l.b16 %v1354
      %v1420 = vunpack.c.h.b16 %v1354
      %v1421 = vunpack.c.l.b16 %v1355
      %v1422 = vunpack.c.h.b16 %v1355
      %v1423 = vunpack.c.l.b16 %v1356
      %v1424 = vunpack.c.h.b16 %v1356
      %v1425 = vunpack.c.l.b16 %v1357
      %v1426 = vunpack.c.h.b16 %v1357
      %v1427 = vunpack.c.l.b16 %v1358
      %v1428 = vunpack.c.h.b16 %v1358
      %v1429 = vunpack.c.l.b16 %v1359
      %v1430 = vunpack.c.h.b16 %v1359
      %v1431 = vunpack.c.l.b16 %v1360
      %v1432 = vunpack.c.h.b16 %v1360
      %v1433 = vunpack.c.l.b16 %v1361
      %v1434 = vunpack.c.h.b16 %v1361
      %v1435 = vunpack.c.l.b16 %v1362
      %v1436 = vunpack.c.h.b16 %v1362
      %v1437 = vunpack.c.l.b16 %v1363
      %v1438 = vunpack.c.h.b16 %v1363
      %v1439 = vunpack.c.l.b16 %v1364
      %v1440 = vunpack.c.h.b16 %v1364
      %v1441 = vunpack.c.l.b16 %v1365
      %v1442 = vunpack.c.h.b16 %v1365
      %v1443 = vunpack.c.l.b16 %v1366
      %v1444 = vunpack.c.h.b16 %v1366
      %v1445 = vunpack.c.l.b16 %v1367
      %v1446 = vunpack.c.h.b16 %v1367
      %v1447 = vunpack.c.l.b16 %v1368
      %v1448 = vunpack.c.h.b16 %v1368
      %v1449 = vunpack.c.l.b16 %v1369
      %v1450 = vunpack.c.h.b16 %v1369
      %v1451 = vunpack.c.l.b16 %v1370
      %v1452 = vunpack.c.h.b16 %v1370
      %v1453 = vunpack.c.l.b16 %v1371
      %v1454 = vunpack.c.h.b16 %v1371
      %v1455 = vunpack.c.l.b16 %v1372
      %v1456 = vunpack.c.h.b16 %v1372
      %v1457 = vunpack.c.l.b16 %v1373
      %v1458 = vunpack.c.h.b16 %v1373
      %v1459 = vunpack.c.l.b16 %v1374
      %v1460 = vunpack.c.h.b16 %v1374
      %v1461 = vunpack.c.l.b16 %v1375
      %v1462 = vunpack.c.h.b16 %v1375
      %v1463 = vunpack.c.l.b16 %v1376
      %v1464 = vunpack.c.h.b16 %v1376
      %v1465 = vunpack.c.l.b16 %v1377
      %v1466 = vunpack.c.h.b16 %v1377
      %v1467 = vunpack.c.l.b16 %v1378
      %v1468 = vunpack.c.h.b16 %v1378
      %v1469 = vunpack.c.l.b16 %v1379
      %v1470 = vunpack.c.h.b16 %v1379
      %v1471 = vunpack.c.l.b16 %v1380
      %v1472 = vunpack.c.h.b16 %v1380
      %v1473 = vunpack.c.l.b16 %v1381
      %v1474 = vunpack.c.h.b16 %v1381
      %v1475 = vunpack.c.l.b16 %v1382
      %v1476 = vunpack.c.h.b16 %v1382
      %v1477 = vunpack.c.l.b16 %v1383
      %v1478 = vunpack.c.h.b16 %v1383
      %v1479 = vunpack.c.l.b16 %v1384
      %v1480 = vunpack.c.h.b16 %v1384
      %v1481 = vpack.c.b16 %v1417, %v1417
      %v1482 = vpack.c.b16 %v1418, %v1418
      %v1483 = vpack.c.b16 %v1419, %v1419
      %v1484 = vpack.c.b16 %v1420, %v1420
      %v1485 = vpack.c.b16 %v1421, %v1421
      %v1486 = vpack.c.b16 %v1422, %v1422
      %v1487 = vpack.c.b16 %v1423, %v1423
      %v1488 = vpack.c.b16 %v1424, %v1424
      %v1489 = vpack.c.b16 %v1425, %v1425
      %v1490 = vpack.c.b16 %v1426, %v1426
      %v1491 = vpack.c.b16 %v1427, %v1427
      %v1492 = vpack.c.b16 %v1428, %v1428
      %v1493 = vpack.c.b16 %v1429, %v1429
      %v1494 = vpack.c.b16 %v1430, %v1430
      %v1495 = vpack.c.b16 %v1431, %v1431
      %v1496 = vpack.c.b16 %v1432, %v1432
      %v1497 = vpack.c.b16 %v1433, %v1433
      %v1498 = vpack.c.b16 %v1434, %v1434
      %v1499 = vpack.c.b16 %v1435, %v1435
      %v1500 = vpack.c.b16 %v1436, %v1436
      %v1501 = vpack.c.b16 %v1437, %v1437
      %v1502 = vpack.c.b16 %v1438, %v1438
      %v1503 = vpack.c.b16 %v1439, %v1439
      %v1504 = vpack.c.b16 %v1440, %v1440
      %v1505 = vpack.c.b16 %v1441, %v1441
      %v1506 = vpack.c.b16 %v1442, %v1442
      %v1507 = vpack.c.b16 %v1443, %v1443
      %v1508 = vpack.c.b16 %v1444, %v1444
      %v1509 = vpack.c.b16 %v1445, %v1445
      %v1510 = vpack.c.b16 %v1446, %v1446
      %v1511 = vpack.c.b16 %v1447, %v1447
      %v1512 = vpack.c.b16 %v1448, %v1448
      %v1513 = vpack.c.b16 %v1449, %v1449
      %v1514 = vpack.c.b16 %v1450, %v1450
      %v1515 = vpack.c.b16 %v1451, %v1451
      %v1516 = vpack.c.b16 %v1452, %v1452
      %v1517 = vpack.c.b16 %v1453, %v1453
      %v1518 = vpack.c.b16 %v1454, %v1454
      %v1519 = vpack.c.b16 %v1455, %v1455
      %v1520 = vpack.c.b16 %v1456, %v1456
      %v1521 = vpack.c.b16 %v1457, %v1457
      %v1522 = vpack.c.b16 %v1458, %v1458
      %v1523 = vpack.c.b16 %v1459, %v1459
      %v1524 = vpack.c.b16 %v1460, %v1460
      %v1525 = vpack.c.b16 %v1461, %v1461
      %v1526 = vpack.c.b16 %v1462, %v1462
      %v1527 = vpack.c.b16 %v1463, %v1463
      %v1528 = vpack.c.b16 %v1464, %v1464
      %v1529 = vpack.c.b16 %v1465, %v1465
      %v1530 = vpack.c.b16 %v1466, %v1466
      %v1531 = vpack.c.b16 %v1467, %v1467
      %v1532 = vpack.c.b16 %v1468, %v1468
      %v1533 = vpack.c.b16 %v1469, %v1469
      %v1534 = vpack.c.b16 %v1470, %v1470
      %v1535 = vpack.c.b16 %v1471, %v1471
      %v1536 = vpack.c.b16 %v1472, %v1472
      %v1537 = vpack.c.b16 %v1473, %v1473
      %v1538 = vpack.c.b16 %v1474, %v1474
      %v1539 = vpack.c.b16 %v1475, %v1475
      %v1540 = vpack.c.b16 %v1476, %v1476
      %v1541 = vpack.c.b16 %v1477, %v1477
      %v1542 = vpack.c.b16 %v1478, %v1478
      %v1543 = vpack.c.b16 %v1479, %v1479
      %v1544 = vpack.c.b16 %v1480, %v1480
      %1609 = vst [vmem:[#allocation3] sm:$0xf] %v1481
      %1610 = vst [vmem:[#allocation3 + $0x4] sm:$0xf] %v1482
      %1611 = vst [vmem:[#allocation3 + $0x8] sm:$0xf] %v1483
      %1612 = vst [vmem:[#allocation3 + $0xc] sm:$0xf] %v1484
      %1613 = vst [vmem:[#allocation3 + $0x10] sm:$0xf] %v1485
      %1614 = vst [vmem:[#allocation3 + $0x14] sm:$0xf] %v1486
      %1615 = vst [vmem:[#allocation3 + $0x18] sm:$0xf] %v1487
      %1616 = vst [vmem:[#allocation3 + $0x1c] sm:$0xf] %v1488
      %1617 = vst [vmem:[#allocation3 + $0x20] sm:$0xf] %v1489
      %1618 = vst [vmem:[#allocation3 + $0x24] sm:$0xf] %v1490
      %1619 = vst [vmem:[#allocation3 + $0x28] sm:$0xf] %v1491
      %1620 = vst [vmem:[#allocation3 + $0x2c] sm:$0xf] %v1492
      %1621 = vst [vmem:[#allocation3 + $0x30] sm:$0xf] %v1493
      %1622 = vst [vmem:[#allocation3 + $0x34] sm:$0xf] %v1494
      %1623 = vst [vmem:[#allocation3 + $0x38] sm:$0xf] %v1495
      %1624 = vst [vmem:[#allocation3 + $0x3c] sm:$0xf] %v1496
      %1625 = vst [vmem:[#allocation3 + $0x40] sm:$0xf] %v1497
      %1626 = vst [vmem:[#allocation3 + $0x44] sm:$0xf] %v1498
      %1627 = vst [vmem:[#allocation3 + $0x48] sm:$0xf] %v1499
      %1628 = vst [vmem:[#allocation3 + $0x4c] sm:$0xf] %v1500
      %1629 = vst [vmem:[#allocation3 + $0x50] sm:$0xf] %v1501
      %1630 = vst [vmem:[#allocation3 + $0x54] sm:$0xf] %v1502
      %1631 = vst [vmem:[#allocation3 + $0x58] sm:$0xf] %v1503
      %1632 = vst [vmem:[#allocation3 + $0x5c] sm:$0xf] %v1504
      %1633 = vst [vmem:[#allocation3 + $0x60] sm:$0xf] %v1505
      %1634 = vst [vmem:[#allocation3 + $0x64] sm:$0xf] %v1506
      %1635 = vst [vmem:[#allocation3 + $0x68] sm:$0xf] %v1507
      %1636 = vst [vmem:[#allocation3 + $0x6c] sm:$0xf] %v1508
      %1637 = vst [vmem:[#allocation3 + $0x70] sm:$0xf] %v1509
      %1638 = vst [vmem:[#allocation3 + $0x74] sm:$0xf] %v1510
      %1639 = vst [vmem:[#allocation3 + $0x78] sm:$0xf] %v1511
      %1640 = vst [vmem:[#allocation3 + $0x7c] sm:$0xf] %v1512
      %1641 = vst [vmem:[#allocation3 + $0x80] sm:$0xf] %v1513
      %1642 = vst [vmem:[#allocation3 + $0x84] sm:$0xf] %v1514
      %1643 = vst [vmem:[#allocation3 + $0x88] sm:$0xf] %v1515
      %1644 = vst [vmem:[#allocation3 + $0x8c] sm:$0xf] %v1516
      %1645 = vst [vmem:[#allocation3 + $0x90] sm:$0xf] %v1517
      %1646 = vst [vmem:[#allocation3 + $0x94] sm:$0xf] %v1518
      %1647 = vst [vmem:[#allocation3 + $0x98] sm:$0xf] %v1519
      %1648 = vst [vmem:[#allocation3 + $0x9c] sm:$0xf] %v1520
      %1649 = vst [vmem:[#allocation3 + $0xa0] sm:$0xf] %v1521
      %1650 = vst [vmem:[#allocation3 + $0xa4] sm:$0xf] %v1522
      %1651 = vst [vmem:[#allocation3 + $0xa8] sm:$0xf] %v1523
      %1652 = vst [vmem:[#allocation3 + $0xac] sm:$0xf] %v1524
      %1653 = vst [vmem:[#allocation3 + $0xb0] sm:$0xf] %v1525
      %1654 = vst [vmem:[#allocation3 + $0xb4] sm:$0xf] %v1526
      %1655 = vst [vmem:[#allocation3 + $0xb8] sm:$0xf] %v1527
      %1656 = vst [vmem:[#allocation3 + $0xbc] sm:$0xf] %v1528
      %1657 = vst [vmem:[#allocation3 + $0xc0] sm:$0xf] %v1529
      %1658 = vst [vmem:[#allocation3 + $0xc4] sm:$0xf] %v1530
      %1659 = vst [vmem:[#allocation3 + $0xc8] sm:$0xf] %v1531
      %1660 = vst [vmem:[#allocation3 + $0xcc] sm:$0xf] %v1532
      %1661 = vst [vmem:[#allocation3 + $0xd0] sm:$0xf] %v1533
      %1662 = vst [vmem:[#allocation3 + $0xd4] sm:$0xf] %v1534
      %1663 = vst [vmem:[#allocation3 + $0xd8] sm:$0xf] %v1535
      %1664 = vst [vmem:[#allocation3 + $0xdc] sm:$0xf] %v1536
      %1665 = vst [vmem:[#allocation3 + $0xe0] sm:$0xf] %v1537
      %1666 = vst [vmem:[#allocation3 + $0xe4] sm:$0xf] %v1538
      %1667 = vst [vmem:[#allocation3 + $0xe8] sm:$0xf] %v1539
      %1668 = vst [vmem:[#allocation3 + $0xec] sm:$0xf] %v1540
      %1669 = vst [vmem:[#allocation3 + $0xf0] sm:$0xf] %v1541
      %1670 = vst [vmem:[#allocation3 + $0xf4] sm:$0xf] %v1542
      %1671 = vst [vmem:[#allocation3 + $0xf8] sm:$0xf] %v1543
      %1672 = vst [vmem:[#allocation3 + $0xfc] sm:$0xf] %v1544
    $region25: #{conv_im2col_bn.1} parent=1 // pred_fallthru
      _
    // Predicated region
    $region26: #{conv_im2col_bn.1} parent=1 // pred_check
      _
    $region27: #{conv_im2col_bn.1} parent=1 // pred_check_branch
      %1674 = sbr.rel (0) target = $region29
    $region28: #{conv_im2col_bn.1} parent=1 // pred_region
      %s1676 = ssub.s32 4096, 4096
      %1677 = vsyncadd [#allocation4], %s1676
      %s1678 = sshll.u32 [#allocation3], 4
      %s1679 = int_to_ptr.vmem [resolvable:$true] %s1678
      %1684 = dma.vmem_to_hbm [thread:$0]  %s1679, 4096, %s4, [#allocation4], 64, 64, 4
    $region29: #{conv_im2col_bn.1} parent=1 // pred_fallthru
      _
    // Predicated region
    $region30: #{conv_im2col_bn.1} parent=1 // pred_check
      _
    $region31: #{conv_im2col_bn.1} parent=1 // pred_check_branch
      %1686 = sbr.rel (0) target = $region33
    $region32: #{conv_im2col_bn.1} parent=1 // pred_region
      %1687 = dma.done [#allocation4], 4096
    $region33: #{conv_im2col_bn.1} parent=1 // pred_fallthru
      _
    %1688 = vsyncpa [#allocation4], 1

</llo_original>
